<compile_context>
chip_gen: v6e
topology: v6e:2x2x1
jax: 0.10.0
libtpu: 0.0.40
codegen_flags: <defaults>
</compile_context>

<pallas_src>
import functools

import jax
import jax.numpy as jnp
from jax import lax
from jax.experimental import pallas as pl
from jax.experimental.pallas import tpu as pltpu

LN_EPS = 1e-6  # matches the repo's LayerNorm eps; make sure it matches your checkpoint.


def bert_embedding(src, seg, word_tbl, seg_tbl, pos_tbl, gamma, beta,
                   *, ln_eps=LN_EPS, tile_rows=None, chunk_rows=None,
                   out_dtype=None):
    """src, seg: [B, S] int32.  Returns [B, S, H] (default float32)."""
    B, S = src.shape
    V, H = word_tbl.shape
    R = B * S
    out_dtype = out_dtype or word_tbl.dtype

    # Row tile: must divide S so the default (arange) position rows can be fetched
    # with a plain BlockSpec slice (block index = t % (S // tile_rows)).
    if tile_rows is None:
        tile_rows = S
        for cand in (512, 256, 128, 64, 32, 16, 8):
            if S % cand == 0:
                tile_rows = cand
                break
    assert S % tile_rows == 0 and tile_rows % 8 == 0, "tile_rows must divide S, mult of 8"
    n_tiles = R // tile_rows
    pos_blocks_per_seq = S // tile_rows

    # Word-row gather chunk (rows per DMA batch, double-buffered).
    if chunk_rows is None:
        chunk_rows = min(32, tile_rows)
    assert tile_rows % chunk_rows == 0 and chunk_rows % 8 == 0
    n_chunks = tile_rows // chunk_rows

    src_flat = src.astype(jnp.int32).reshape(R)          # scalar prefetch -> SMEM
    seg2 = seg.astype(jnp.int32).reshape(R, 1)            # (R, 1) ids, lane dim = 1
    gamma2 = gamma.reshape(1, H).astype(jnp.float32)
    beta2 = beta.reshape(1, H).astype(jnp.float32)

    def kernel(src_ids_ref,      # SMEM (R,) int32          [scalar prefetch]
               seg_ids_ref,      # VMEM (tile_rows, 1) int32
               word_hbm,         # ANY/HBM (V, H)
               seg_tbl_ref,      # VMEM (2, H)
               pos_ref,          # VMEM (tile_rows, H)
               gamma_ref,        # VMEM (1, H)
               beta_ref,         # VMEM (1, H)
               out_ref,          # VMEM (tile_rows, H)
               wbuf,             # VMEM (2*chunk_rows, H) scratch: gathered word rows
               sems):            # DMA sems (2*chunk_rows,)
        tile_start = pl.program_id(0) * tile_rows

        def start_chunk(c, slot):
            base = tile_start + c * chunk_rows
            for r in range(chunk_rows):                       # static unroll
                buf_row = slot * chunk_rows + r
                tok = src_ids_ref[base + r]                   # SMEM scalar read
                pltpu.make_async_copy(word_hbm.at[tok],
                                      wbuf.at[buf_row],
                                      sems.at[buf_row]).start()

        def wait_chunk(slot):
            for r in range(chunk_rows):
                buf_row = slot * chunk_rows + r
                # Wait descriptor only needs matching shape/bytes.
                pltpu.make_async_copy(word_hbm.at[0],
                                      wbuf.at[buf_row],
                                      sems.at[buf_row]).wait()

        # Prime slot 0, then: prefetch chunk c+1 into the other slot while
        # computing chunk c (manual double-buffered gather).
        start_chunk(0, 0)
        for c in range(n_chunks):                             # static, unrolled
            slot = c % 2
            if c + 1 < n_chunks:
                start_chunk(c + 1, 1 - slot)
            wait_chunk(slot)

            rows = pl.ds(c * chunk_rows, chunk_rows)          # static slice of the tile
            word_emb = wbuf[pl.ds(slot * chunk_rows, chunk_rows), :].astype(jnp.float32)

            # Segment embedding (2 rows): lane-broadcast select on the id.
            seg_ids = seg_ids_ref[rows, :]                    # (chunk, 1)
            seg_emb = jnp.where(seg_ids == 0,
                                seg_tbl_ref[0:1, :],
                                seg_tbl_ref[1:2, :])          # (chunk, H)

            emb = word_emb + seg_emb + pos_ref[rows, :].astype(jnp.float32)

            # TODO(synk): nn.Dropout is identity in eval mode; training-mode dropout
            # (pltpu.prng_random_bits mask) not emitted here.

            # Post LayerNorm over the hidden axis; gamma folded into the rsqrt scale.
            mean = jnp.mean(emb, axis=-1, keepdims=True)
            centered = emb - mean
            var = jnp.mean(centered * centered, axis=-1, keepdims=True)
            scale = lax.rsqrt(var + ln_eps) * gamma_ref[...]  # (chunk, H) via broadcast
            out_ref[rows, :] = (centered * scale + beta_ref[...]).astype(out_ref.dtype)

    grid_spec = pltpu.PrefetchScalarGridSpec(
        num_scalar_prefetch=1,              # flattened token ids -> SMEM
        grid=(n_tiles,),
        in_specs=[
            pl.BlockSpec((tile_rows, 1), lambda t, ids: (t, 0)),    # segment ids
            pl.BlockSpec(memory_space=pl.ANY),                      # word table (HBM)
            pl.BlockSpec((2, H), lambda t, ids: (0, 0)),            # segment table
            pl.BlockSpec((tile_rows, H),
                         lambda t, ids: (t % pos_blocks_per_seq, 0)),  # pos rows
            pl.BlockSpec((1, H), lambda t, ids: (0, 0)),            # LN gamma
            pl.BlockSpec((1, H), lambda t, ids: (0, 0)),            # LN beta
        ],
        out_specs=pl.BlockSpec((tile_rows, H), lambda t, ids: (t, 0)),
        scratch_shapes=[
            pltpu.VMEM((2 * chunk_rows, H), word_tbl.dtype),        # gather double-buffer
            pltpu.SemaphoreType.DMA((2 * chunk_rows,)),
        ],
    )

    out_flat = pl.pallas_call(
        kernel,
        out_shape=jax.ShapeDtypeStruct((R, H), out_dtype),
        grid_spec=grid_spec,
        compiler_params=pltpu.CompilerParams(
            dimension_semantics=("parallel",),      # row tiles shard across TCs (v7x)
            vmem_limit_bytes=32 * 1024 * 1024,      # small footprint; safe on v5e/v6e/v7x
        ),
    )(src_flat, seg2, word_tbl, seg_tbl, pos_tbl, gamma2, beta2)

    return out_flat.reshape(B, S, H)


def bert_embedding_ref(src, seg, word_tbl, seg_tbl, pos_tbl, gamma, beta,
                       ln_eps=LN_EPS):
    """Plain-JAX reference mirroring the PyTorch forward (eval mode)."""
    B, S = src.shape
    word_emb = word_tbl[src]                       # [B, S, H]
    seg_emb = seg_tbl[seg]                         # [B, S, H]
    pos_emb = pos_tbl[jnp.arange(S)][None]         # [1, S, H]
    emb = word_emb + seg_emb + pos_emb
    mean = jnp.mean(emb, axis=-1, keepdims=True)
    var = jnp.mean((emb - mean) ** 2, axis=-1, keepdims=True)
    return (emb - mean) * lax.rsqrt(var + ln_eps) * gamma + beta


if __name__ == "__main__":
    # Small config consistent with the module: args.emb_size == args.hidden_size.
    B, S = 2, 16           # batch, seq_length
    V = 64                 # vocab_size
    H = 128                # hidden_size / emb_size
    MAX_LEN = 32           # args.max_length

    key = jax.random.PRNGKey(0)
    k_w, k_p, k_s, k_g, k_b, k_src, k_seg = jax.random.split(key, 7)

    word_tbl = jax.random.normal(k_w, (V, H), jnp.float32) * 0.02
    pos_tbl = jax.random.normal(k_p, (MAX_LEN, H), jnp.float32) * 0.02
    seg_tbl = jax.random.normal(k_s, (2, H), jnp.float32) * 0.02
    gamma = jnp.ones((H,), jnp.float32) + 0.1 * jax.random.normal(k_g, (H,), jnp.float32)
    beta = 0.1 * jax.random.normal(k_b, (H,), jnp.float32)

    src = jax.random.randint(k_src, (B, S), 0, V, dtype=jnp.int32)
    seg = jax.random.randint(k_seg, (B, S), 0, 2, dtype=jnp.int32)

    # chunk_rows=8 with tile_rows=16 exercises the double-buffered gather path.
    out = bert_embedding(src, seg, word_tbl, seg_tbl, pos_tbl, gamma, beta,
                         chunk_rows=8)
    out = jax.block_until_ready(out)

    ref = bert_embedding_ref(src, seg, word_tbl, seg_tbl, pos_tbl, gamma, beta)
    assert out.shape == (B, S, H)
    assert jnp.allclose(out, ref, atol=1e-4, rtol=1e-4)

    print("KERNEL_OK")
</pallas_src>

<mosaic_0001>
module attributes {stable_mosaic.version = 11 : i64} {
  func.func @kernel(%arg0: i32, %arg1: memref<32xi32, #tpu.memory_space<smem>>, %arg2: memref<16x1xi32, #tpu.memory_space<vmem>>, %arg3: memref<64x128xf32, #tpu.memory_space<any>>, %arg4: memref<2x128xf32, #tpu.memory_space<vmem>>, %arg5: memref<16x128xf32, #tpu.memory_space<vmem>>, %arg6: memref<1x128xf32, #tpu.memory_space<vmem>>, %arg7: memref<1x128xf32, #tpu.memory_space<vmem>>, %arg8: memref<16x128xf32, #tpu.memory_space<vmem>>, %arg9: memref<16x128xf32, #tpu.memory_space<vmem>>, %arg10: memref<16x!tpu.dma_semaphore, #tpu.memory_space<semaphore_mem>>) attributes {dimension_semantics = [#tpu.dimension_semantics<parallel>], iteration_bounds = array<i64: 2>, scalar_prefetch = 1 : i64, scratch_operands = 2 : i64, tpu.core_type = #tpu.core_type<tc>, window_params = [{transform_indices = @transform_0, window_bounds = array<i64: 16, 1>}, {}, {pipeline_mode = #tpu.pipeline_mode<synchronous>, transform_indices = @transform_2, window_bounds = array<i64: 2, 128>}, {transform_indices = @transform_3, window_bounds = array<i64: 16, 128>}, {pipeline_mode = #tpu.pipeline_mode<synchronous>, transform_indices = @transform_4, window_bounds = array<i64: 1, 128>}, {pipeline_mode = #tpu.pipeline_mode<synchronous>, transform_indices = @transform_5, window_bounds = array<i64: 1, 128>}, {transform_indices = @transform_6, window_bounds = array<i64: 16, 128>}]} {
    %c16_i32 = arith.constant 16 : i32
    %0 = arith.muli %arg0, %c16_i32 : i32
    %c0_i32 = arith.constant 0 : i32
    %1 = arith.addi %0, %c0_i32 : i32
    %c0_i32_0 = arith.constant 0 : i32
    %2 = arith.addi %1, %c0_i32_0 : i32
    %3 = arith.index_cast %2 : i32 to index
    %4 = memref.load %arg1[%3] : memref<32xi32, #tpu.memory_space<smem>>
    %c0_i32_1 = arith.constant 0 : i32
    %c0_i32_2 = arith.constant 0 : i32
    %c0_i32_3 = arith.constant 0 : i32
    %5 = tpu.memref_slice %arg3[%4, %c0_i32_3] : memref<64x128xf32, #tpu.memory_space<any>> -> memref<1x128xf32, #tpu.memory_space<any>>
    %6 = tpu.memref_squeeze %5 : memref<1x128xf32, #tpu.memory_space<any>> -> memref<128xf32, #tpu.memory_space<any>>
    %c0_i32_4 = arith.constant 0 : i32
    %7 = tpu.memref_slice %arg9[%c0_i32_1, %c0_i32_4] : memref<16x128xf32, #tpu.memory_space<vmem>> -> memref<1x128xf32, #tpu.memory_space<vmem>>
    %8 = tpu.memref_squeeze %7 : memref<1x128xf32, #tpu.memory_space<vmem>> -> memref<128xf32, #tpu.memory_space<vmem>>
    %9 = tpu.memref_slice %arg10[%c0_i32_2] : memref<16x!tpu.dma_semaphore, #tpu.memory_space<semaphore_mem>> -> memref<1x!tpu.dma_semaphore, #tpu.memory_space<semaphore_mem>>
    %10 = tpu.memref_squeeze %9 : memref<1x!tpu.dma_semaphore, #tpu.memory_space<semaphore_mem>> -> memref<!tpu.dma_semaphore, #tpu.memory_space<semaphore_mem>>
    tpu.enqueue_dma source(%6 : memref<128xf32, #tpu.memory_space<any>>) target(%8 : memref<128xf32, #tpu.memory_space<vmem>>) target_semaphore(%10 : memref<!tpu.dma_semaphore, #tpu.memory_space<semaphore_mem>>)
    %c1_i32 = arith.constant 1 : i32
    %11 = arith.addi %1, %c1_i32 : i32
    %12 = arith.index_cast %11 : i32 to index
    %13 = memref.load %arg1[%12] : memref<32xi32, #tpu.memory_space<smem>>
    %c1_i32_5 = arith.constant 1 : i32
    %c1_i32_6 = arith.constant 1 : i32
    %c0_i32_7 = arith.constant 0 : i32
    %14 = tpu.memref_slice %arg3[%13, %c0_i32_7] : memref<64x128xf32, #tpu.memory_space<any>> -> memref<1x128xf32, #tpu.memory_space<any>>
    %15 = tpu.memref_squeeze %14 : memref<1x128xf32, #tpu.memory_space<any>> -> memref<128xf32, #tpu.memory_space<any>>
    %c0_i32_8 = arith.constant 0 : i32
    %16 = tpu.memref_slice %arg9[%c1_i32_5, %c0_i32_8] : memref<16x128xf32, #tpu.memory_space<vmem>> -> memref<1x128xf32, #tpu.memory_space<vmem>>
    %17 = tpu.memref_squeeze %16 : memref<1x128xf32, #tpu.memory_space<vmem>> -> memref<128xf32, #tpu.memory_space<vmem>>
    %18 = tpu.memref_slice %arg10[%c1_i32_6] : memref<16x!tpu.dma_semaphore, #tpu.memory_space<semaphore_mem>> -> memref<1x!tpu.dma_semaphore, #tpu.memory_space<semaphore_mem>>
    %19 = tpu.memref_squeeze %18 : memref<1x!tpu.dma_semaphore, #tpu.memory_space<semaphore_mem>> -> memref<!tpu.dma_semaphore, #tpu.memory_space<semaphore_mem>>
    tpu.enqueue_dma source(%15 : memref<128xf32, #tpu.memory_space<any>>) target(%17 : memref<128xf32, #tpu.memory_space<vmem>>) target_semaphore(%19 : memref<!tpu.dma_semaphore, #tpu.memory_space<semaphore_mem>>)
    %c2_i32 = arith.constant 2 : i32
    %20 = arith.addi %1, %c2_i32 : i32
    %21 = arith.index_cast %20 : i32 to index
    %22 = memref.load %arg1[%21] : memref<32xi32, #tpu.memory_space<smem>>
    %c2_i32_9 = arith.constant 2 : i32
    %c2_i32_10 = arith.constant 2 : i32
    %c0_i32_11 = arith.constant 0 : i32
    %23 = tpu.memref_slice %arg3[%22, %c0_i32_11] : memref<64x128xf32, #tpu.memory_space<any>> -> memref<1x128xf32, #tpu.memory_space<any>>
    %24 = tpu.memref_squeeze %23 : memref<1x128xf32, #tpu.memory_space<any>> -> memref<128xf32, #tpu.memory_space<any>>
    %c0_i32_12 = arith.constant 0 : i32
    %25 = tpu.memref_slice %arg9[%c2_i32_9, %c0_i32_12] : memref<16x128xf32, #tpu.memory_space<vmem>> -> memref<1x128xf32, #tpu.memory_space<vmem>>
    %26 = tpu.memref_squeeze %25 : memref<1x128xf32, #tpu.memory_space<vmem>> -> memref<128xf32, #tpu.memory_space<vmem>>
    %27 = tpu.memref_slice %arg10[%c2_i32_10] : memref<16x!tpu.dma_semaphore, #tpu.memory_space<semaphore_mem>> -> memref<1x!tpu.dma_semaphore, #tpu.memory_space<semaphore_mem>>
    %28 = tpu.memref_squeeze %27 : memref<1x!tpu.dma_semaphore, #tpu.memory_space<semaphore_mem>> -> memref<!tpu.dma_semaphore, #tpu.memory_space<semaphore_mem>>
    tpu.enqueue_dma source(%24 : memref<128xf32, #tpu.memory_space<any>>) target(%26 : memref<128xf32, #tpu.memory_space<vmem>>) target_semaphore(%28 : memref<!tpu.dma_semaphore, #tpu.memory_space<semaphore_mem>>)
    %c3_i32 = arith.constant 3 : i32
    %29 = arith.addi %1, %c3_i32 : i32
    %30 = arith.index_cast %29 : i32 to index
    %31 = memref.load %arg1[%30] : memref<32xi32, #tpu.memory_space<smem>>
    %c3_i32_13 = arith.constant 3 : i32
    %c3_i32_14 = arith.constant 3 : i32
    %c0_i32_15 = arith.constant 0 : i32
    %32 = tpu.memref_slice %arg3[%31, %c0_i32_15] : memref<64x128xf32, #tpu.memory_space<any>> -> memref<1x128xf32, #tpu.memory_space<any>>
    %33 = tpu.memref_squeeze %32 : memref<1x128xf32, #tpu.memory_space<any>> -> memref<128xf32, #tpu.memory_space<any>>
    %c0_i32_16 = arith.constant 0 : i32
    %34 = tpu.memref_slice %arg9[%c3_i32_13, %c0_i32_16] : memref<16x128xf32, #tpu.memory_space<vmem>> -> memref<1x128xf32, #tpu.memory_space<vmem>>
    %35 = tpu.memref_squeeze %34 : memref<1x128xf32, #tpu.memory_space<vmem>> -> memref<128xf32, #tpu.memory_space<vmem>>
    %36 = tpu.memref_slice %arg10[%c3_i32_14] : memref<16x!tpu.dma_semaphore, #tpu.memory_space<semaphore_mem>> -> memref<1x!tpu.dma_semaphore, #tpu.memory_space<semaphore_mem>>
    %37 = tpu.memref_squeeze %36 : memref<1x!tpu.dma_semaphore, #tpu.memory_space<semaphore_mem>> -> memref<!tpu.dma_semaphore, #tpu.memory_space<semaphore_mem>>
    tpu.enqueue_dma source(%33 : memref<128xf32, #tpu.memory_space<any>>) target(%35 : memref<128xf32, #tpu.memory_space<vmem>>) target_semaphore(%37 : memref<!tpu.dma_semaphore, #tpu.memory_space<semaphore_mem>>)
    %c4_i32 = arith.constant 4 : i32
    %38 = arith.addi %1, %c4_i32 : i32
    %39 = arith.index_cast %38 : i32 to index
    %40 = memref.load %arg1[%39] : memref<32xi32, #tpu.memory_space<smem>>
    %c4_i32_17 = arith.constant 4 : i32
    %c4_i32_18 = arith.constant 4 : i32
    %c0_i32_19 = arith.constant 0 : i32
    %41 = tpu.memref_slice %arg3[%40, %c0_i32_19] : memref<64x128xf32, #tpu.memory_space<any>> -> memref<1x128xf32, #tpu.memory_space<any>>
    %42 = tpu.memref_squeeze %41 : memref<1x128xf32, #tpu.memory_space<any>> -> memref<128xf32, #tpu.memory_space<any>>
    %c0_i32_20 = arith.constant 0 : i32
    %43 = tpu.memref_slice %arg9[%c4_i32_17, %c0_i32_20] : memref<16x128xf32, #tpu.memory_space<vmem>> -> memref<1x128xf32, #tpu.memory_space<vmem>>
    %44 = tpu.memref_squeeze %43 : memref<1x128xf32, #tpu.memory_space<vmem>> -> memref<128xf32, #tpu.memory_space<vmem>>
    %45 = tpu.memref_slice %arg10[%c4_i32_18] : memref<16x!tpu.dma_semaphore, #tpu.memory_space<semaphore_mem>> -> memref<1x!tpu.dma_semaphore, #tpu.memory_space<semaphore_mem>>
    %46 = tpu.memref_squeeze %45 : memref<1x!tpu.dma_semaphore, #tpu.memory_space<semaphore_mem>> -> memref<!tpu.dma_semaphore, #tpu.memory_space<semaphore_mem>>
    tpu.enqueue_dma source(%42 : memref<128xf32, #tpu.memory_space<any>>) target(%44 : memref<128xf32, #tpu.memory_space<vmem>>) target_semaphore(%46 : memref<!tpu.dma_semaphore, #tpu.memory_space<semaphore_mem>>)
    %c5_i32 = arith.constant 5 : i32
    %47 = arith.addi %1, %c5_i32 : i32
    %48 = arith.index_cast %47 : i32 to index
    %49 = memref.load %arg1[%48] : memref<32xi32, #tpu.memory_space<smem>>
    %c5_i32_21 = arith.constant 5 : i32
    %c5_i32_22 = arith.constant 5 : i32
    %c0_i32_23 = arith.constant 0 : i32
    %50 = tpu.memref_slice %arg3[%49, %c0_i32_23] : memref<64x128xf32, #tpu.memory_space<any>> -> memref<1x128xf32, #tpu.memory_space<any>>
    %51 = tpu.memref_squeeze %50 : memref<1x128xf32, #tpu.memory_space<any>> -> memref<128xf32, #tpu.memory_space<any>>
    %c0_i32_24 = arith.constant 0 : i32
    %52 = tpu.memref_slice %arg9[%c5_i32_21, %c0_i32_24] : memref<16x128xf32, #tpu.memory_space<vmem>> -> memref<1x128xf32, #tpu.memory_space<vmem>>
    %53 = tpu.memref_squeeze %52 : memref<1x128xf32, #tpu.memory_space<vmem>> -> memref<128xf32, #tpu.memory_space<vmem>>
    %54 = tpu.memref_slice %arg10[%c5_i32_22] : memref<16x!tpu.dma_semaphore, #tpu.memory_space<semaphore_mem>> -> memref<1x!tpu.dma_semaphore, #tpu.memory_space<semaphore_mem>>
    %55 = tpu.memref_squeeze %54 : memref<1x!tpu.dma_semaphore, #tpu.memory_space<semaphore_mem>> -> memref<!tpu.dma_semaphore, #tpu.memory_space<semaphore_mem>>
    tpu.enqueue_dma source(%51 : memref<128xf32, #tpu.memory_space<any>>) target(%53 : memref<128xf32, #tpu.memory_space<vmem>>) target_semaphore(%55 : memref<!tpu.dma_semaphore, #tpu.memory_space<semaphore_mem>>)
    %c6_i32 = arith.constant 6 : i32
    %56 = arith.addi %1, %c6_i32 : i32
    %57 = arith.index_cast %56 : i32 to index
    %58 = memref.load %arg1[%57] : memref<32xi32, #tpu.memory_space<smem>>
    %c6_i32_25 = arith.constant 6 : i32
    %c6_i32_26 = arith.constant 6 : i32
    %c0_i32_27 = arith.constant 0 : i32
    %59 = tpu.memref_slice %arg3[%58, %c0_i32_27] : memref<64x128xf32, #tpu.memory_space<any>> -> memref<1x128xf32, #tpu.memory_space<any>>
    %60 = tpu.memref_squeeze %59 : memref<1x128xf32, #tpu.memory_space<any>> -> memref<128xf32, #tpu.memory_space<any>>
    %c0_i32_28 = arith.constant 0 : i32
    %61 = tpu.memref_slice %arg9[%c6_i32_25, %c0_i32_28] : memref<16x128xf32, #tpu.memory_space<vmem>> -> memref<1x128xf32, #tpu.memory_space<vmem>>
    %62 = tpu.memref_squeeze %61 : memref<1x128xf32, #tpu.memory_space<vmem>> -> memref<128xf32, #tpu.memory_space<vmem>>
    %63 = tpu.memref_slice %arg10[%c6_i32_26] : memref<16x!tpu.dma_semaphore, #tpu.memory_space<semaphore_mem>> -> memref<1x!tpu.dma_semaphore, #tpu.memory_space<semaphore_mem>>
    %64 = tpu.memref_squeeze %63 : memref<1x!tpu.dma_semaphore, #tpu.memory_space<semaphore_mem>> -> memref<!tpu.dma_semaphore, #tpu.memory_space<semaphore_mem>>
    tpu.enqueue_dma source(%60 : memref<128xf32, #tpu.memory_space<any>>) target(%62 : memref<128xf32, #tpu.memory_space<vmem>>) target_semaphore(%64 : memref<!tpu.dma_semaphore, #tpu.memory_space<semaphore_mem>>)
    %c7_i32 = arith.constant 7 : i32
    %65 = arith.addi %1, %c7_i32 : i32
    %66 = arith.index_cast %65 : i32 to index
    %67 = memref.load %arg1[%66] : memref<32xi32, #tpu.memory_space<smem>>
    %c7_i32_29 = arith.constant 7 : i32
    %c7_i32_30 = arith.constant 7 : i32
    %c0_i32_31 = arith.constant 0 : i32
    %68 = tpu.memref_slice %arg3[%67, %c0_i32_31] : memref<64x128xf32, #tpu.memory_space<any>> -> memref<1x128xf32, #tpu.memory_space<any>>
    %69 = tpu.memref_squeeze %68 : memref<1x128xf32, #tpu.memory_space<any>> -> memref<128xf32, #tpu.memory_space<any>>
    %c0_i32_32 = arith.constant 0 : i32
    %70 = tpu.memref_slice %arg9[%c7_i32_29, %c0_i32_32] : memref<16x128xf32, #tpu.memory_space<vmem>> -> memref<1x128xf32, #tpu.memory_space<vmem>>
    %71 = tpu.memref_squeeze %70 : memref<1x128xf32, #tpu.memory_space<vmem>> -> memref<128xf32, #tpu.memory_space<vmem>>
    %72 = tpu.memref_slice %arg10[%c7_i32_30] : memref<16x!tpu.dma_semaphore, #tpu.memory_space<semaphore_mem>> -> memref<1x!tpu.dma_semaphore, #tpu.memory_space<semaphore_mem>>
    %73 = tpu.memref_squeeze %72 : memref<1x!tpu.dma_semaphore, #tpu.memory_space<semaphore_mem>> -> memref<!tpu.dma_semaphore, #tpu.memory_space<semaphore_mem>>
    tpu.enqueue_dma source(%69 : memref<128xf32, #tpu.memory_space<any>>) target(%71 : memref<128xf32, #tpu.memory_space<vmem>>) target_semaphore(%73 : memref<!tpu.dma_semaphore, #tpu.memory_space<semaphore_mem>>)
    %c8_i32 = arith.constant 8 : i32
    %74 = arith.addi %0, %c8_i32 : i32
    %c0_i32_33 = arith.constant 0 : i32
    %75 = arith.addi %74, %c0_i32_33 : i32
    %76 = arith.index_cast %75 : i32 to index
    %77 = memref.load %arg1[%76] : memref<32xi32, #tpu.memory_space<smem>>
    %c8_i32_34 = arith.constant 8 : i32
    %c8_i32_35 = arith.constant 8 : i32
    %c0_i32_36 = arith.constant 0 : i32
    %78 = tpu.memref_slice %arg3[%77, %c0_i32_36] : memref<64x128xf32, #tpu.memory_space<any>> -> memref<1x128xf32, #tpu.memory_space<any>>
    %79 = tpu.memref_squeeze %78 : memref<1x128xf32, #tpu.memory_space<any>> -> memref<128xf32, #tpu.memory_space<any>>
    %c0_i32_37 = arith.constant 0 : i32
    %80 = tpu.memref_slice %arg9[%c8_i32_34, %c0_i32_37] : memref<16x128xf32, #tpu.memory_space<vmem>> -> memref<1x128xf32, #tpu.memory_space<vmem>>
    %81 = tpu.memref_squeeze %80 : memref<1x128xf32, #tpu.memory_space<vmem>> -> memref<128xf32, #tpu.memory_space<vmem>>
    %82 = tpu.memref_slice %arg10[%c8_i32_35] : memref<16x!tpu.dma_semaphore, #tpu.memory_space<semaphore_mem>> -> memref<1x!tpu.dma_semaphore, #tpu.memory_space<semaphore_mem>>
    %83 = tpu.memref_squeeze %82 : memref<1x!tpu.dma_semaphore, #tpu.memory_space<semaphore_mem>> -> memref<!tpu.dma_semaphore, #tpu.memory_space<semaphore_mem>>
    tpu.enqueue_dma source(%79 : memref<128xf32, #tpu.memory_space<any>>) target(%81 : memref<128xf32, #tpu.memory_space<vmem>>) target_semaphore(%83 : memref<!tpu.dma_semaphore, #tpu.memory_space<semaphore_mem>>)
    %c1_i32_38 = arith.constant 1 : i32
    %84 = arith.addi %74, %c1_i32_38 : i32
    %85 = arith.index_cast %84 : i32 to index
    %86 = memref.load %arg1[%85] : memref<32xi32, #tpu.memory_space<smem>>
    %c9_i32 = arith.constant 9 : i32
    %c9_i32_39 = arith.constant 9 : i32
    %c0_i32_40 = arith.constant 0 : i32
    %87 = tpu.memref_slice %arg3[%86, %c0_i32_40] : memref<64x128xf32, #tpu.memory_space<any>> -> memref<1x128xf32, #tpu.memory_space<any>>
    %88 = tpu.memref_squeeze %87 : memref<1x128xf32, #tpu.memory_space<any>> -> memref<128xf32, #tpu.memory_space<any>>
    %c0_i32_41 = arith.constant 0 : i32
    %89 = tpu.memref_slice %arg9[%c9_i32, %c0_i32_41] : memref<16x128xf32, #tpu.memory_space<vmem>> -> memref<1x128xf32, #tpu.memory_space<vmem>>
    %90 = tpu.memref_squeeze %89 : memref<1x128xf32, #tpu.memory_space<vmem>> -> memref<128xf32, #tpu.memory_space<vmem>>
    %91 = tpu.memref_slice %arg10[%c9_i32_39] : memref<16x!tpu.dma_semaphore, #tpu.memory_space<semaphore_mem>> -> memref<1x!tpu.dma_semaphore, #tpu.memory_space<semaphore_mem>>
    %92 = tpu.memref_squeeze %91 : memref<1x!tpu.dma_semaphore, #tpu.memory_space<semaphore_mem>> -> memref<!tpu.dma_semaphore, #tpu.memory_space<semaphore_mem>>
    tpu.enqueue_dma source(%88 : memref<128xf32, #tpu.memory_space<any>>) target(%90 : memref<128xf32, #tpu.memory_space<vmem>>) target_semaphore(%92 : memref<!tpu.dma_semaphore, #tpu.memory_space<semaphore_mem>>)
    %c2_i32_42 = arith.constant 2 : i32
    %93 = arith.addi %74, %c2_i32_42 : i32
    %94 = arith.index_cast %93 : i32 to index
    %95 = memref.load %arg1[%94] : memref<32xi32, #tpu.memory_space<smem>>
    %c10_i32 = arith.constant 10 : i32
    %c10_i32_43 = arith.constant 10 : i32
    %c0_i32_44 = arith.constant 0 : i32
    %96 = tpu.memref_slice %arg3[%95, %c0_i32_44] : memref<64x128xf32, #tpu.memory_space<any>> -> memref<1x128xf32, #tpu.memory_space<any>>
    %97 = tpu.memref_squeeze %96 : memref<1x128xf32, #tpu.memory_space<any>> -> memref<128xf32, #tpu.memory_space<any>>
    %c0_i32_45 = arith.constant 0 : i32
    %98 = tpu.memref_slice %arg9[%c10_i32, %c0_i32_45] : memref<16x128xf32, #tpu.memory_space<vmem>> -> memref<1x128xf32, #tpu.memory_space<vmem>>
    %99 = tpu.memref_squeeze %98 : memref<1x128xf32, #tpu.memory_space<vmem>> -> memref<128xf32, #tpu.memory_space<vmem>>
    %100 = tpu.memref_slice %arg10[%c10_i32_43] : memref<16x!tpu.dma_semaphore, #tpu.memory_space<semaphore_mem>> -> memref<1x!tpu.dma_semaphore, #tpu.memory_space<semaphore_mem>>
    %101 = tpu.memref_squeeze %100 : memref<1x!tpu.dma_semaphore, #tpu.memory_space<semaphore_mem>> -> memref<!tpu.dma_semaphore, #tpu.memory_space<semaphore_mem>>
    tpu.enqueue_dma source(%97 : memref<128xf32, #tpu.memory_space<any>>) target(%99 : memref<128xf32, #tpu.memory_space<vmem>>) target_semaphore(%101 : memref<!tpu.dma_semaphore, #tpu.memory_space<semaphore_mem>>)
    %c3_i32_46 = arith.constant 3 : i32
    %102 = arith.addi %74, %c3_i32_46 : i32
    %103 = arith.index_cast %102 : i32 to index
    %104 = memref.load %arg1[%103] : memref<32xi32, #tpu.memory_space<smem>>
    %c11_i32 = arith.constant 11 : i32
    %c11_i32_47 = arith.constant 11 : i32
    %c0_i32_48 = arith.constant 0 : i32
    %105 = tpu.memref_slice %arg3[%104, %c0_i32_48] : memref<64x128xf32, #tpu.memory_space<any>> -> memref<1x128xf32, #tpu.memory_space<any>>
    %106 = tpu.memref_squeeze %105 : memref<1x128xf32, #tpu.memory_space<any>> -> memref<128xf32, #tpu.memory_space<any>>
    %c0_i32_49 = arith.constant 0 : i32
    %107 = tpu.memref_slice %arg9[%c11_i32, %c0_i32_49] : memref<16x128xf32, #tpu.memory_space<vmem>> -> memref<1x128xf32, #tpu.memory_space<vmem>>
    %108 = tpu.memref_squeeze %107 : memref<1x128xf32, #tpu.memory_space<vmem>> -> memref<128xf32, #tpu.memory_space<vmem>>
    %109 = tpu.memref_slice %arg10[%c11_i32_47] : memref<16x!tpu.dma_semaphore, #tpu.memory_space<semaphore_mem>> -> memref<1x!tpu.dma_semaphore, #tpu.memory_space<semaphore_mem>>
    %110 = tpu.memref_squeeze %109 : memref<1x!tpu.dma_semaphore, #tpu.memory_space<semaphore_mem>> -> memref<!tpu.dma_semaphore, #tpu.memory_space<semaphore_mem>>
    tpu.enqueue_dma source(%106 : memref<128xf32, #tpu.memory_space<any>>) target(%108 : memref<128xf32, #tpu.memory_space<vmem>>) target_semaphore(%110 : memref<!tpu.dma_semaphore, #tpu.memory_space<semaphore_mem>>)
    %c4_i32_50 = arith.constant 4 : i32
    %111 = arith.addi %74, %c4_i32_50 : i32
    %112 = arith.index_cast %111 : i32 to index
    %113 = memref.load %arg1[%112] : memref<32xi32, #tpu.memory_space<smem>>
    %c12_i32 = arith.constant 12 : i32
    %c12_i32_51 = arith.constant 12 : i32
    %c0_i32_52 = arith.constant 0 : i32
    %114 = tpu.memref_slice %arg3[%113, %c0_i32_52] : memref<64x128xf32, #tpu.memory_space<any>> -> memref<1x128xf32, #tpu.memory_space<any>>
    %115 = tpu.memref_squeeze %114 : memref<1x128xf32, #tpu.memory_space<any>> -> memref<128xf32, #tpu.memory_space<any>>
    %c0_i32_53 = arith.constant 0 : i32
    %116 = tpu.memref_slice %arg9[%c12_i32, %c0_i32_53] : memref<16x128xf32, #tpu.memory_space<vmem>> -> memref<1x128xf32, #tpu.memory_space<vmem>>
    %117 = tpu.memref_squeeze %116 : memref<1x128xf32, #tpu.memory_space<vmem>> -> memref<128xf32, #tpu.memory_space<vmem>>
    %118 = tpu.memref_slice %arg10[%c12_i32_51] : memref<16x!tpu.dma_semaphore, #tpu.memory_space<semaphore_mem>> -> memref<1x!tpu.dma_semaphore, #tpu.memory_space<semaphore_mem>>
    %119 = tpu.memref_squeeze %118 : memref<1x!tpu.dma_semaphore, #tpu.memory_space<semaphore_mem>> -> memref<!tpu.dma_semaphore, #tpu.memory_space<semaphore_mem>>
    tpu.enqueue_dma source(%115 : memref<128xf32, #tpu.memory_space<any>>) target(%117 : memref<128xf32, #tpu.memory_space<vmem>>) target_semaphore(%119 : memref<!tpu.dma_semaphore, #tpu.memory_space<semaphore_mem>>)
    %c5_i32_54 = arith.constant 5 : i32
    %120 = arith.addi %74, %c5_i32_54 : i32
    %121 = arith.index_cast %120 : i32 to index
    %122 = memref.load %arg1[%121] : memref<32xi32, #tpu.memory_space<smem>>
    %c13_i32 = arith.constant 13 : i32
    %c13_i32_55 = arith.constant 13 : i32
    %c0_i32_56 = arith.constant 0 : i32
    %123 = tpu.memref_slice %arg3[%122, %c0_i32_56] : memref<64x128xf32, #tpu.memory_space<any>> -> memref<1x128xf32, #tpu.memory_space<any>>
    %124 = tpu.memref_squeeze %123 : memref<1x128xf32, #tpu.memory_space<any>> -> memref<128xf32, #tpu.memory_space<any>>
    %c0_i32_57 = arith.constant 0 : i32
    %125 = tpu.memref_slice %arg9[%c13_i32, %c0_i32_57] : memref<16x128xf32, #tpu.memory_space<vmem>> -> memref<1x128xf32, #tpu.memory_space<vmem>>
    %126 = tpu.memref_squeeze %125 : memref<1x128xf32, #tpu.memory_space<vmem>> -> memref<128xf32, #tpu.memory_space<vmem>>
    %127 = tpu.memref_slice %arg10[%c13_i32_55] : memref<16x!tpu.dma_semaphore, #tpu.memory_space<semaphore_mem>> -> memref<1x!tpu.dma_semaphore, #tpu.memory_space<semaphore_mem>>
    %128 = tpu.memref_squeeze %127 : memref<1x!tpu.dma_semaphore, #tpu.memory_space<semaphore_mem>> -> memref<!tpu.dma_semaphore, #tpu.memory_space<semaphore_mem>>
    tpu.enqueue_dma source(%124 : memref<128xf32, #tpu.memory_space<any>>) target(%126 : memref<128xf32, #tpu.memory_space<vmem>>) target_semaphore(%128 : memref<!tpu.dma_semaphore, #tpu.memory_space<semaphore_mem>>)
    %c6_i32_58 = arith.constant 6 : i32
    %129 = arith.addi %74, %c6_i32_58 : i32
    %130 = arith.index_cast %129 : i32 to index
    %131 = memref.load %arg1[%130] : memref<32xi32, #tpu.memory_space<smem>>
    %c14_i32 = arith.constant 14 : i32
    %c14_i32_59 = arith.constant 14 : i32
    %c0_i32_60 = arith.constant 0 : i32
    %132 = tpu.memref_slice %arg3[%131, %c0_i32_60] : memref<64x128xf32, #tpu.memory_space<any>> -> memref<1x128xf32, #tpu.memory_space<any>>
    %133 = tpu.memref_squeeze %132 : memref<1x128xf32, #tpu.memory_space<any>> -> memref<128xf32, #tpu.memory_space<any>>
    %c0_i32_61 = arith.constant 0 : i32
    %134 = tpu.memref_slice %arg9[%c14_i32, %c0_i32_61] : memref<16x128xf32, #tpu.memory_space<vmem>> -> memref<1x128xf32, #tpu.memory_space<vmem>>
    %135 = tpu.memref_squeeze %134 : memref<1x128xf32, #tpu.memory_space<vmem>> -> memref<128xf32, #tpu.memory_space<vmem>>
    %136 = tpu.memref_slice %arg10[%c14_i32_59] : memref<16x!tpu.dma_semaphore, #tpu.memory_space<semaphore_mem>> -> memref<1x!tpu.dma_semaphore, #tpu.memory_space<semaphore_mem>>
    %137 = tpu.memref_squeeze %136 : memref<1x!tpu.dma_semaphore, #tpu.memory_space<semaphore_mem>> -> memref<!tpu.dma_semaphore, #tpu.memory_space<semaphore_mem>>
    tpu.enqueue_dma source(%133 : memref<128xf32, #tpu.memory_space<any>>) target(%135 : memref<128xf32, #tpu.memory_space<vmem>>) target_semaphore(%137 : memref<!tpu.dma_semaphore, #tpu.memory_space<semaphore_mem>>)
    %c7_i32_62 = arith.constant 7 : i32
    %138 = arith.addi %74, %c7_i32_62 : i32
    %139 = arith.index_cast %138 : i32 to index
    %140 = memref.load %arg1[%139] : memref<32xi32, #tpu.memory_space<smem>>
    %c15_i32 = arith.constant 15 : i32
    %c15_i32_63 = arith.constant 15 : i32
    %c0_i32_64 = arith.constant 0 : i32
    %141 = tpu.memref_slice %arg3[%140, %c0_i32_64] : memref<64x128xf32, #tpu.memory_space<any>> -> memref<1x128xf32, #tpu.memory_space<any>>
    %142 = tpu.memref_squeeze %141 : memref<1x128xf32, #tpu.memory_space<any>> -> memref<128xf32, #tpu.memory_space<any>>
    %c0_i32_65 = arith.constant 0 : i32
    %143 = tpu.memref_slice %arg9[%c15_i32, %c0_i32_65] : memref<16x128xf32, #tpu.memory_space<vmem>> -> memref<1x128xf32, #tpu.memory_space<vmem>>
    %144 = tpu.memref_squeeze %143 : memref<1x128xf32, #tpu.memory_space<vmem>> -> memref<128xf32, #tpu.memory_space<vmem>>
    %145 = tpu.memref_slice %arg10[%c15_i32_63] : memref<16x!tpu.dma_semaphore, #tpu.memory_space<semaphore_mem>> -> memref<1x!tpu.dma_semaphore, #tpu.memory_space<semaphore_mem>>
    %146 = tpu.memref_squeeze %145 : memref<1x!tpu.dma_semaphore, #tpu.memory_space<semaphore_mem>> -> memref<!tpu.dma_semaphore, #tpu.memory_space<semaphore_mem>>
    tpu.enqueue_dma source(%142 : memref<128xf32, #tpu.memory_space<any>>) target(%144 : memref<128xf32, #tpu.memory_space<vmem>>) target_semaphore(%146 : memref<!tpu.dma_semaphore, #tpu.memory_space<semaphore_mem>>)
    %c0_i32_66 = arith.constant 0 : i32
    %c0_i32_67 = arith.constant 0 : i32
    %c0_i32_68 = arith.constant 0 : i32
    %c0_i32_69 = arith.constant 0 : i32
    %147 = tpu.memref_slice %arg3[%c0_i32_66, %c0_i32_69] : memref<64x128xf32, #tpu.memory_space<any>> -> memref<1x128xf32, #tpu.memory_space<any>>
    %148 = tpu.memref_squeeze %147 : memref<1x128xf32, #tpu.memory_space<any>> -> memref<128xf32, #tpu.memory_space<any>>
    %c0_i32_70 = arith.constant 0 : i32
    %149 = tpu.memref_slice %arg9[%c0_i32_67, %c0_i32_70] : memref<16x128xf32, #tpu.memory_space<vmem>> -> memref<1x128xf32, #tpu.memory_space<vmem>>
    %150 = tpu.memref_squeeze %149 : memref<1x128xf32, #tpu.memory_space<vmem>> -> memref<128xf32, #tpu.memory_space<vmem>>
    %151 = tpu.memref_slice %arg10[%c0_i32_68] : memref<16x!tpu.dma_semaphore, #tpu.memory_space<semaphore_mem>> -> memref<1x!tpu.dma_semaphore, #tpu.memory_space<semaphore_mem>>
    %152 = tpu.memref_squeeze %151 : memref<1x!tpu.dma_semaphore, #tpu.memory_space<semaphore_mem>> -> memref<!tpu.dma_semaphore, #tpu.memory_space<semaphore_mem>>
    tpu.wait_dma2 semaphore(%152 : memref<!tpu.dma_semaphore, #tpu.memory_space<semaphore_mem>>) src(%148 : memref<128xf32, #tpu.memory_space<any>>) dst(%150 : memref<128xf32, #tpu.memory_space<vmem>>)
    %c0_i32_71 = arith.constant 0 : i32
    %c1_i32_72 = arith.constant 1 : i32
    %c1_i32_73 = arith.constant 1 : i32
    %c0_i32_74 = arith.constant 0 : i32
    %153 = tpu.memref_slice %arg3[%c0_i32_71, %c0_i32_74] : memref<64x128xf32, #tpu.memory_space<any>> -> memref<1x128xf32, #tpu.memory_space<any>>
    %154 = tpu.memref_squeeze %153 : memref<1x128xf32, #tpu.memory_space<any>> -> memref<128xf32, #tpu.memory_space<any>>
    %c0_i32_75 = arith.constant 0 : i32
    %155 = tpu.memref_slice %arg9[%c1_i32_72, %c0_i32_75] : memref<16x128xf32, #tpu.memory_space<vmem>> -> memref<1x128xf32, #tpu.memory_space<vmem>>
    %156 = tpu.memref_squeeze %155 : memref<1x128xf32, #tpu.memory_space<vmem>> -> memref<128xf32, #tpu.memory_space<vmem>>
    %157 = tpu.memref_slice %arg10[%c1_i32_73] : memref<16x!tpu.dma_semaphore, #tpu.memory_space<semaphore_mem>> -> memref<1x!tpu.dma_semaphore, #tpu.memory_space<semaphore_mem>>
    %158 = tpu.memref_squeeze %157 : memref<1x!tpu.dma_semaphore, #tpu.memory_space<semaphore_mem>> -> memref<!tpu.dma_semaphore, #tpu.memory_space<semaphore_mem>>
    tpu.wait_dma2 semaphore(%158 : memref<!tpu.dma_semaphore, #tpu.memory_space<semaphore_mem>>) src(%154 : memref<128xf32, #tpu.memory_space<any>>) dst(%156 : memref<128xf32, #tpu.memory_space<vmem>>)
    %c0_i32_76 = arith.constant 0 : i32
    %c2_i32_77 = arith.constant 2 : i32
    %c2_i32_78 = arith.constant 2 : i32
    %c0_i32_79 = arith.constant 0 : i32
    %159 = tpu.memref_slice %arg3[%c0_i32_76, %c0_i32_79] : memref<64x128xf32, #tpu.memory_space<any>> -> memref<1x128xf32, #tpu.memory_space<any>>
    %160 = tpu.memref_squeeze %159 : memref<1x128xf32, #tpu.memory_space<any>> -> memref<128xf32, #tpu.memory_space<any>>
    %c0_i32_80 = arith.constant 0 : i32
    %161 = tpu.memref_slice %arg9[%c2_i32_77, %c0_i32_80] : memref<16x128xf32, #tpu.memory_space<vmem>> -> memref<1x128xf32, #tpu.memory_space<vmem>>
    %162 = tpu.memref_squeeze %161 : memref<1x128xf32, #tpu.memory_space<vmem>> -> memref<128xf32, #tpu.memory_space<vmem>>
    %163 = tpu.memref_slice %arg10[%c2_i32_78] : memref<16x!tpu.dma_semaphore, #tpu.memory_space<semaphore_mem>> -> memref<1x!tpu.dma_semaphore, #tpu.memory_space<semaphore_mem>>
    %164 = tpu.memref_squeeze %163 : memref<1x!tpu.dma_semaphore, #tpu.memory_space<semaphore_mem>> -> memref<!tpu.dma_semaphore, #tpu.memory_space<semaphore_mem>>
    tpu.wait_dma2 semaphore(%164 : memref<!tpu.dma_semaphore, #tpu.memory_space<semaphore_mem>>) src(%160 : memref<128xf32, #tpu.memory_space<any>>) dst(%162 : memref<128xf32, #tpu.memory_space<vmem>>)
    %c0_i32_81 = arith.constant 0 : i32
    %c3_i32_82 = arith.constant 3 : i32
    %c3_i32_83 = arith.constant 3 : i32
    %c0_i32_84 = arith.constant 0 : i32
    %165 = tpu.memref_slice %arg3[%c0_i32_81, %c0_i32_84] : memref<64x128xf32, #tpu.memory_space<any>> -> memref<1x128xf32, #tpu.memory_space<any>>
    %166 = tpu.memref_squeeze %165 : memref<1x128xf32, #tpu.memory_space<any>> -> memref<128xf32, #tpu.memory_space<any>>
    %c0_i32_85 = arith.constant 0 : i32
    %167 = tpu.memref_slice %arg9[%c3_i32_82, %c0_i32_85] : memref<16x128xf32, #tpu.memory_space<vmem>> -> memref<1x128xf32, #tpu.memory_space<vmem>>
    %168 = tpu.memref_squeeze %167 : memref<1x128xf32, #tpu.memory_space<vmem>> -> memref<128xf32, #tpu.memory_space<vmem>>
    %169 = tpu.memref_slice %arg10[%c3_i32_83] : memref<16x!tpu.dma_semaphore, #tpu.memory_space<semaphore_mem>> -> memref<1x!tpu.dma_semaphore, #tpu.memory_space<semaphore_mem>>
    %170 = tpu.memref_squeeze %169 : memref<1x!tpu.dma_semaphore, #tpu.memory_space<semaphore_mem>> -> memref<!tpu.dma_semaphore, #tpu.memory_space<semaphore_mem>>
    tpu.wait_dma2 semaphore(%170 : memref<!tpu.dma_semaphore, #tpu.memory_space<semaphore_mem>>) src(%166 : memref<128xf32, #tpu.memory_space<any>>) dst(%168 : memref<128xf32, #tpu.memory_space<vmem>>)
    %c0_i32_86 = arith.constant 0 : i32
    %c4_i32_87 = arith.constant 4 : i32
    %c4_i32_88 = arith.constant 4 : i32
    %c0_i32_89 = arith.constant 0 : i32
    %171 = tpu.memref_slice %arg3[%c0_i32_86, %c0_i32_89] : memref<64x128xf32, #tpu.memory_space<any>> -> memref<1x128xf32, #tpu.memory_space<any>>
    %172 = tpu.memref_squeeze %171 : memref<1x128xf32, #tpu.memory_space<any>> -> memref<128xf32, #tpu.memory_space<any>>
    %c0_i32_90 = arith.constant 0 : i32
    %173 = tpu.memref_slice %arg9[%c4_i32_87, %c0_i32_90] : memref<16x128xf32, #tpu.memory_space<vmem>> -> memref<1x128xf32, #tpu.memory_space<vmem>>
    %174 = tpu.memref_squeeze %173 : memref<1x128xf32, #tpu.memory_space<vmem>> -> memref<128xf32, #tpu.memory_space<vmem>>
    %175 = tpu.memref_slice %arg10[%c4_i32_88] : memref<16x!tpu.dma_semaphore, #tpu.memory_space<semaphore_mem>> -> memref<1x!tpu.dma_semaphore, #tpu.memory_space<semaphore_mem>>
    %176 = tpu.memref_squeeze %175 : memref<1x!tpu.dma_semaphore, #tpu.memory_space<semaphore_mem>> -> memref<!tpu.dma_semaphore, #tpu.memory_space<semaphore_mem>>
    tpu.wait_dma2 semaphore(%176 : memref<!tpu.dma_semaphore, #tpu.memory_space<semaphore_mem>>) src(%172 : memref<128xf32, #tpu.memory_space<any>>) dst(%174 : memref<128xf32, #tpu.memory_space<vmem>>)
    %c0_i32_91 = arith.constant 0 : i32
    %c5_i32_92 = arith.constant 5 : i32
    %c5_i32_93 = arith.constant 5 : i32
    %c0_i32_94 = arith.constant 0 : i32
    %177 = tpu.memref_slice %arg3[%c0_i32_91, %c0_i32_94] : memref<64x128xf32, #tpu.memory_space<any>> -> memref<1x128xf32, #tpu.memory_space<any>>
    %178 = tpu.memref_squeeze %177 : memref<1x128xf32, #tpu.memory_space<any>> -> memref<128xf32, #tpu.memory_space<any>>
    %c0_i32_95 = arith.constant 0 : i32
    %179 = tpu.memref_slice %arg9[%c5_i32_92, %c0_i32_95] : memref<16x128xf32, #tpu.memory_space<vmem>> -> memref<1x128xf32, #tpu.memory_space<vmem>>
    %180 = tpu.memref_squeeze %179 : memref<1x128xf32, #tpu.memory_space<vmem>> -> memref<128xf32, #tpu.memory_space<vmem>>
    %181 = tpu.memref_slice %arg10[%c5_i32_93] : memref<16x!tpu.dma_semaphore, #tpu.memory_space<semaphore_mem>> -> memref<1x!tpu.dma_semaphore, #tpu.memory_space<semaphore_mem>>
    %182 = tpu.memref_squeeze %181 : memref<1x!tpu.dma_semaphore, #tpu.memory_space<semaphore_mem>> -> memref<!tpu.dma_semaphore, #tpu.memory_space<semaphore_mem>>
    tpu.wait_dma2 semaphore(%182 : memref<!tpu.dma_semaphore, #tpu.memory_space<semaphore_mem>>) src(%178 : memref<128xf32, #tpu.memory_space<any>>) dst(%180 : memref<128xf32, #tpu.memory_space<vmem>>)
    %c0_i32_96 = arith.constant 0 : i32
    %c6_i32_97 = arith.constant 6 : i32
    %c6_i32_98 = arith.constant 6 : i32
    %c0_i32_99 = arith.constant 0 : i32
    %183 = tpu.memref_slice %arg3[%c0_i32_96, %c0_i32_99] : memref<64x128xf32, #tpu.memory_space<any>> -> memref<1x128xf32, #tpu.memory_space<any>>
    %184 = tpu.memref_squeeze %183 : memref<1x128xf32, #tpu.memory_space<any>> -> memref<128xf32, #tpu.memory_space<any>>
    %c0_i32_100 = arith.constant 0 : i32
    %185 = tpu.memref_slice %arg9[%c6_i32_97, %c0_i32_100] : memref<16x128xf32, #tpu.memory_space<vmem>> -> memref<1x128xf32, #tpu.memory_space<vmem>>
    %186 = tpu.memref_squeeze %185 : memref<1x128xf32, #tpu.memory_space<vmem>> -> memref<128xf32, #tpu.memory_space<vmem>>
    %187 = tpu.memref_slice %arg10[%c6_i32_98] : memref<16x!tpu.dma_semaphore, #tpu.memory_space<semaphore_mem>> -> memref<1x!tpu.dma_semaphore, #tpu.memory_space<semaphore_mem>>
    %188 = tpu.memref_squeeze %187 : memref<1x!tpu.dma_semaphore, #tpu.memory_space<semaphore_mem>> -> memref<!tpu.dma_semaphore, #tpu.memory_space<semaphore_mem>>
    tpu.wait_dma2 semaphore(%188 : memref<!tpu.dma_semaphore, #tpu.memory_space<semaphore_mem>>) src(%184 : memref<128xf32, #tpu.memory_space<any>>) dst(%186 : memref<128xf32, #tpu.memory_space<vmem>>)
    %c0_i32_101 = arith.constant 0 : i32
    %c7_i32_102 = arith.constant 7 : i32
    %c7_i32_103 = arith.constant 7 : i32
    %c0_i32_104 = arith.constant 0 : i32
    %189 = tpu.memref_slice %arg3[%c0_i32_101, %c0_i32_104] : memref<64x128xf32, #tpu.memory_space<any>> -> memref<1x128xf32, #tpu.memory_space<any>>
    %190 = tpu.memref_squeeze %189 : memref<1x128xf32, #tpu.memory_space<any>> -> memref<128xf32, #tpu.memory_space<any>>
    %c0_i32_105 = arith.constant 0 : i32
    %191 = tpu.memref_slice %arg9[%c7_i32_102, %c0_i32_105] : memref<16x128xf32, #tpu.memory_space<vmem>> -> memref<1x128xf32, #tpu.memory_space<vmem>>
    %192 = tpu.memref_squeeze %191 : memref<1x128xf32, #tpu.memory_space<vmem>> -> memref<128xf32, #tpu.memory_space<vmem>>
    %193 = tpu.memref_slice %arg10[%c7_i32_103] : memref<16x!tpu.dma_semaphore, #tpu.memory_space<semaphore_mem>> -> memref<1x!tpu.dma_semaphore, #tpu.memory_space<semaphore_mem>>
    %194 = tpu.memref_squeeze %193 : memref<1x!tpu.dma_semaphore, #tpu.memory_space<semaphore_mem>> -> memref<!tpu.dma_semaphore, #tpu.memory_space<semaphore_mem>>
    tpu.wait_dma2 semaphore(%194 : memref<!tpu.dma_semaphore, #tpu.memory_space<semaphore_mem>>) src(%190 : memref<128xf32, #tpu.memory_space<any>>) dst(%192 : memref<128xf32, #tpu.memory_space<vmem>>)
    %c0 = arith.constant 0 : index
    %c0_106 = arith.constant 0 : index
    %195 = vector.load %arg9[%c0, %c0_106] : memref<16x128xf32, #tpu.memory_space<vmem>>, vector<8x128xf32>
    %c0_107 = arith.constant 0 : index
    %c0_108 = arith.constant 0 : index
    %196 = vector.load %arg2[%c0_107, %c0_108] : memref<16x1xi32, #tpu.memory_space<vmem>>, vector<8x1xi32>
    %c0_i32_109 = arith.constant 0 : i32
    %197 = vector.broadcast %c0_i32_109 : i32 to vector<8x1xi32>
    %198 = arith.cmpi eq, %196, %197 : vector<8x1xi32>
    %c0_110 = arith.constant 0 : index
    %c0_111 = arith.constant 0 : index
    %199 = vector.load %arg4[%c0_110, %c0_111] : memref<2x128xf32, #tpu.memory_space<vmem>>, vector<1x128xf32>
    %c1 = arith.constant 1 : index
    %c0_112 = arith.constant 0 : index
    %200 = vector.load %arg4[%c1, %c0_112] : memref<2x128xf32, #tpu.memory_space<vmem>>, vector<1x128xf32>
    %201 = vector.shape_cast %198 : vector<8x1xi1> to vector<8x1xi1>
    %202 = vector.broadcast %201 : vector<8x1xi1> to vector<8x128xi1>
    %203 = vector.shape_cast %199 : vector<1x128xf32> to vector<1x128xf32>
    %204 = vector.broadcast %203 : vector<1x128xf32> to vector<8x128xf32>
    %205 = vector.shape_cast %200 : vector<1x128xf32> to vector<1x128xf32>
    %206 = vector.broadcast %205 : vector<1x128xf32> to vector<8x128xf32>
    %207 = arith.select %202, %204, %206 : vector<8x128xi1>, vector<8x128xf32>
    %208 = arith.addf %195, %207 : vector<8x128xf32>
    %c0_113 = arith.constant 0 : index
    %c0_114 = arith.constant 0 : index
    %209 = vector.load %arg5[%c0_113, %c0_114] : memref<16x128xf32, #tpu.memory_space<vmem>>, vector<8x128xf32>
    %210 = arith.addf %208, %209 : vector<8x128xf32>
    %cst = arith.constant dense<0.000000e+00> : vector<8xf32>
    %211 = vector.multi_reduction <add>, %210, %cst [1] : vector<8x128xf32> to vector<8xf32>
    %212 = vector.shape_cast %211 : vector<8xf32> to vector<8x1xf32>
    %cst_115 = arith.constant 1.280000e+02 : f32
    %213 = vector.broadcast %cst_115 : f32 to vector<8x1xf32>
    %214 = arith.divf %212, %213 : vector<8x1xf32>
    %215 = vector.broadcast %214 : vector<8x1xf32> to vector<8x128xf32>
    %216 = arith.subf %210, %215 : vector<8x128xf32>
    %217 = arith.mulf %216, %216 : vector<8x128xf32>
    %cst_116 = arith.constant dense<0.000000e+00> : vector<8xf32>
    %218 = vector.multi_reduction <add>, %217, %cst_116 [1] : vector<8x128xf32> to vector<8xf32>
    %219 = vector.shape_cast %218 : vector<8xf32> to vector<8x1xf32>
    %cst_117 = arith.constant 1.280000e+02 : f32
    %220 = vector.broadcast %cst_117 : f32 to vector<8x1xf32>
    %221 = arith.divf %219, %220 : vector<8x1xf32>
    %cst_118 = arith.constant 9.99999997E-7 : f32
    %222 = vector.broadcast %cst_118 : f32 to vector<8x1xf32>
    %223 = arith.addf %221, %222 : vector<8x1xf32>
    %224 = math.rsqrt %223 : vector<8x1xf32>
    %c0_119 = arith.constant 0 : index
    %c0_120 = arith.constant 0 : index
    %225 = vector.load %arg6[%c0_119, %c0_120] : memref<1x128xf32, #tpu.memory_space<vmem>>, vector<1x128xf32>
    %226 = vector.broadcast %224 : vector<8x1xf32> to vector<8x128xf32>
    %227 = vector.broadcast %225 : vector<1x128xf32> to vector<8x128xf32>
    %228 = arith.mulf %226, %227 : vector<8x128xf32>
    %229 = arith.mulf %216, %228 : vector<8x128xf32>
    %c0_121 = arith.constant 0 : index
    %c0_122 = arith.constant 0 : index
    %230 = vector.load %arg7[%c0_121, %c0_122] : memref<1x128xf32, #tpu.memory_space<vmem>>, vector<1x128xf32>
    %231 = vector.broadcast %230 : vector<1x128xf32> to vector<8x128xf32>
    %232 = arith.addf %229, %231 : vector<8x128xf32>
    %c0_123 = arith.constant 0 : index
    %c0_124 = arith.constant 0 : index
    %233 = vector.load %arg8[%c0_123, %c0_124] : memref<16x128xf32, #tpu.memory_space<vmem>>, vector<8x128xf32>
    tpu.vector_store %arg8[%c0_123, %c0_124], %232 {strides = array<i32>} : memref<16x128xf32, #tpu.memory_space<vmem>>, vector<8x128xf32>,
    %c0_i32_125 = arith.constant 0 : i32
    %c8_i32_126 = arith.constant 8 : i32
    %c8_i32_127 = arith.constant 8 : i32
    %c0_i32_128 = arith.constant 0 : i32
    %234 = tpu.memref_slice %arg3[%c0_i32_125, %c0_i32_128] : memref<64x128xf32, #tpu.memory_space<any>> -> memref<1x128xf32, #tpu.memory_space<any>>
    %235 = tpu.memref_squeeze %234 : memref<1x128xf32, #tpu.memory_space<any>> -> memref<128xf32, #tpu.memory_space<any>>
    %c0_i32_129 = arith.constant 0 : i32
    %236 = tpu.memref_slice %arg9[%c8_i32_126, %c0_i32_129] : memref<16x128xf32, #tpu.memory_space<vmem>> -> memref<1x128xf32, #tpu.memory_space<vmem>>
    %237 = tpu.memref_squeeze %236 : memref<1x128xf32, #tpu.memory_space<vmem>> -> memref<128xf32, #tpu.memory_space<vmem>>
    %238 = tpu.memref_slice %arg10[%c8_i32_127] : memref<16x!tpu.dma_semaphore, #tpu.memory_space<semaphore_mem>> -> memref<1x!tpu.dma_semaphore, #tpu.memory_space<semaphore_mem>>
    %239 = tpu.memref_squeeze %238 : memref<1x!tpu.dma_semaphore, #tpu.memory_space<semaphore_mem>> -> memref<!tpu.dma_semaphore, #tpu.memory_space<semaphore_mem>>
    tpu.wait_dma2 semaphore(%239 : memref<!tpu.dma_semaphore, #tpu.memory_space<semaphore_mem>>) src(%235 : memref<128xf32, #tpu.memory_space<any>>) dst(%237 : memref<128xf32, #tpu.memory_space<vmem>>)
    %c0_i32_130 = arith.constant 0 : i32
    %c9_i32_131 = arith.constant 9 : i32
    %c9_i32_132 = arith.constant 9 : i32
    %c0_i32_133 = arith.constant 0 : i32
    %240 = tpu.memref_slice %arg3[%c0_i32_130, %c0_i32_133] : memref<64x128xf32, #tpu.memory_space<any>> -> memref<1x128xf32, #tpu.memory_space<any>>
    %241 = tpu.memref_squeeze %240 : memref<1x128xf32, #tpu.memory_space<any>> -> memref<128xf32, #tpu.memory_space<any>>
    %c0_i32_134 = arith.constant 0 : i32
    %242 = tpu.memref_slice %arg9[%c9_i32_131, %c0_i32_134] : memref<16x128xf32, #tpu.memory_space<vmem>> -> memref<1x128xf32, #tpu.memory_space<vmem>>
    %243 = tpu.memref_squeeze %242 : memref<1x128xf32, #tpu.memory_space<vmem>> -> memref<128xf32, #tpu.memory_space<vmem>>
    %244 = tpu.memref_slice %arg10[%c9_i32_132] : memref<16x!tpu.dma_semaphore, #tpu.memory_space<semaphore_mem>> -> memref<1x!tpu.dma_semaphore, #tpu.memory_space<semaphore_mem>>
    %245 = tpu.memref_squeeze %244 : memref<1x!tpu.dma_semaphore, #tpu.memory_space<semaphore_mem>> -> memref<!tpu.dma_semaphore, #tpu.memory_space<semaphore_mem>>
    tpu.wait_dma2 semaphore(%245 : memref<!tpu.dma_semaphore, #tpu.memory_space<semaphore_mem>>) src(%241 : memref<128xf32, #tpu.memory_space<any>>) dst(%243 : memref<128xf32, #tpu.memory_space<vmem>>)
    %c0_i32_135 = arith.constant 0 : i32
    %c10_i32_136 = arith.constant 10 : i32
    %c10_i32_137 = arith.constant 10 : i32
    %c0_i32_138 = arith.constant 0 : i32
    %246 = tpu.memref_slice %arg3[%c0_i32_135, %c0_i32_138] : memref<64x128xf32, #tpu.memory_space<any>> -> memref<1x128xf32, #tpu.memory_space<any>>
    %247 = tpu.memref_squeeze %246 : memref<1x128xf32, #tpu.memory_space<any>> -> memref<128xf32, #tpu.memory_space<any>>
    %c0_i32_139 = arith.constant 0 : i32
    %248 = tpu.memref_slice %arg9[%c10_i32_136, %c0_i32_139] : memref<16x128xf32, #tpu.memory_space<vmem>> -> memref<1x128xf32, #tpu.memory_space<vmem>>
    %249 = tpu.memref_squeeze %248 : memref<1x128xf32, #tpu.memory_space<vmem>> -> memref<128xf32, #tpu.memory_space<vmem>>
    %250 = tpu.memref_slice %arg10[%c10_i32_137] : memref<16x!tpu.dma_semaphore, #tpu.memory_space<semaphore_mem>> -> memref<1x!tpu.dma_semaphore, #tpu.memory_space<semaphore_mem>>
    %251 = tpu.memref_squeeze %250 : memref<1x!tpu.dma_semaphore, #tpu.memory_space<semaphore_mem>> -> memref<!tpu.dma_semaphore, #tpu.memory_space<semaphore_mem>>
    tpu.wait_dma2 semaphore(%251 : memref<!tpu.dma_semaphore, #tpu.memory_space<semaphore_mem>>) src(%247 : memref<128xf32, #tpu.memory_space<any>>) dst(%249 : memref<128xf32, #tpu.memory_space<vmem>>)
    %c0_i32_140 = arith.constant 0 : i32
    %c11_i32_141 = arith.constant 11 : i32
    %c11_i32_142 = arith.constant 11 : i32
    %c0_i32_143 = arith.constant 0 : i32
    %252 = tpu.memref_slice %arg3[%c0_i32_140, %c0_i32_143] : memref<64x128xf32, #tpu.memory_space<any>> -> memref<1x128xf32, #tpu.memory_space<any>>
    %253 = tpu.memref_squeeze %252 : memref<1x128xf32, #tpu.memory_space<any>> -> memref<128xf32, #tpu.memory_space<any>>
    %c0_i32_144 = arith.constant 0 : i32
    %254 = tpu.memref_slice %arg9[%c11_i32_141, %c0_i32_144] : memref<16x128xf32, #tpu.memory_space<vmem>> -> memref<1x128xf32, #tpu.memory_space<vmem>>
    %255 = tpu.memref_squeeze %254 : memref<1x128xf32, #tpu.memory_space<vmem>> -> memref<128xf32, #tpu.memory_space<vmem>>
    %256 = tpu.memref_slice %arg10[%c11_i32_142] : memref<16x!tpu.dma_semaphore, #tpu.memory_space<semaphore_mem>> -> memref<1x!tpu.dma_semaphore, #tpu.memory_space<semaphore_mem>>
    %257 = tpu.memref_squeeze %256 : memref<1x!tpu.dma_semaphore, #tpu.memory_space<semaphore_mem>> -> memref<!tpu.dma_semaphore, #tpu.memory_space<semaphore_mem>>
    tpu.wait_dma2 semaphore(%257 : memref<!tpu.dma_semaphore, #tpu.memory_space<semaphore_mem>>) src(%253 : memref<128xf32, #tpu.memory_space<any>>) dst(%255 : memref<128xf32, #tpu.memory_space<vmem>>)
    %c0_i32_145 = arith.constant 0 : i32
    %c12_i32_146 = arith.constant 12 : i32
    %c12_i32_147 = arith.constant 12 : i32
    %c0_i32_148 = arith.constant 0 : i32
    %258 = tpu.memref_slice %arg3[%c0_i32_145, %c0_i32_148] : memref<64x128xf32, #tpu.memory_space<any>> -> memref<1x128xf32, #tpu.memory_space<any>>
    %259 = tpu.memref_squeeze %258 : memref<1x128xf32, #tpu.memory_space<any>> -> memref<128xf32, #tpu.memory_space<any>>
    %c0_i32_149 = arith.constant 0 : i32
    %260 = tpu.memref_slice %arg9[%c12_i32_146, %c0_i32_149] : memref<16x128xf32, #tpu.memory_space<vmem>> -> memref<1x128xf32, #tpu.memory_space<vmem>>
    %261 = tpu.memref_squeeze %260 : memref<1x128xf32, #tpu.memory_space<vmem>> -> memref<128xf32, #tpu.memory_space<vmem>>
    %262 = tpu.memref_slice %arg10[%c12_i32_147] : memref<16x!tpu.dma_semaphore, #tpu.memory_space<semaphore_mem>> -> memref<1x!tpu.dma_semaphore, #tpu.memory_space<semaphore_mem>>
    %263 = tpu.memref_squeeze %262 : memref<1x!tpu.dma_semaphore, #tpu.memory_space<semaphore_mem>> -> memref<!tpu.dma_semaphore, #tpu.memory_space<semaphore_mem>>
    tpu.wait_dma2 semaphore(%263 : memref<!tpu.dma_semaphore, #tpu.memory_space<semaphore_mem>>) src(%259 : memref<128xf32, #tpu.memory_space<any>>) dst(%261 : memref<128xf32, #tpu.memory_space<vmem>>)
    %c0_i32_150 = arith.constant 0 : i32
    %c13_i32_151 = arith.constant 13 : i32
    %c13_i32_152 = arith.constant 13 : i32
    %c0_i32_153 = arith.constant 0 : i32
    %264 = tpu.memref_slice %arg3[%c0_i32_150, %c0_i32_153] : memref<64x128xf32, #tpu.memory_space<any>> -> memref<1x128xf32, #tpu.memory_space<any>>
    %265 = tpu.memref_squeeze %264 : memref<1x128xf32, #tpu.memory_space<any>> -> memref<128xf32, #tpu.memory_space<any>>
    %c0_i32_154 = arith.constant 0 : i32
    %266 = tpu.memref_slice %arg9[%c13_i32_151, %c0_i32_154] : memref<16x128xf32, #tpu.memory_space<vmem>> -> memref<1x128xf32, #tpu.memory_space<vmem>>
    %267 = tpu.memref_squeeze %266 : memref<1x128xf32, #tpu.memory_space<vmem>> -> memref<128xf32, #tpu.memory_space<vmem>>
    %268 = tpu.memref_slice %arg10[%c13_i32_152] : memref<16x!tpu.dma_semaphore, #tpu.memory_space<semaphore_mem>> -> memref<1x!tpu.dma_semaphore, #tpu.memory_space<semaphore_mem>>
    %269 = tpu.memref_squeeze %268 : memref<1x!tpu.dma_semaphore, #tpu.memory_space<semaphore_mem>> -> memref<!tpu.dma_semaphore, #tpu.memory_space<semaphore_mem>>
    tpu.wait_dma2 semaphore(%269 : memref<!tpu.dma_semaphore, #tpu.memory_space<semaphore_mem>>) src(%265 : memref<128xf32, #tpu.memory_space<any>>) dst(%267 : memref<128xf32, #tpu.memory_space<vmem>>)
    %c0_i32_155 = arith.constant 0 : i32
    %c14_i32_156 = arith.constant 14 : i32
    %c14_i32_157 = arith.constant 14 : i32
    %c0_i32_158 = arith.constant 0 : i32
    %270 = tpu.memref_slice %arg3[%c0_i32_155, %c0_i32_158] : memref<64x128xf32, #tpu.memory_space<any>> -> memref<1x128xf32, #tpu.memory_space<any>>
    %271 = tpu.memref_squeeze %270 : memref<1x128xf32, #tpu.memory_space<any>> -> memref<128xf32, #tpu.memory_space<any>>
    %c0_i32_159 = arith.constant 0 : i32
    %272 = tpu.memref_slice %arg9[%c14_i32_156, %c0_i32_159] : memref<16x128xf32, #tpu.memory_space<vmem>> -> memref<1x128xf32, #tpu.memory_space<vmem>>
    %273 = tpu.memref_squeeze %272 : memref<1x128xf32, #tpu.memory_space<vmem>> -> memref<128xf32, #tpu.memory_space<vmem>>
    %274 = tpu.memref_slice %arg10[%c14_i32_157] : memref<16x!tpu.dma_semaphore, #tpu.memory_space<semaphore_mem>> -> memref<1x!tpu.dma_semaphore, #tpu.memory_space<semaphore_mem>>
    %275 = tpu.memref_squeeze %274 : memref<1x!tpu.dma_semaphore, #tpu.memory_space<semaphore_mem>> -> memref<!tpu.dma_semaphore, #tpu.memory_space<semaphore_mem>>
    tpu.wait_dma2 semaphore(%275 : memref<!tpu.dma_semaphore, #tpu.memory_space<semaphore_mem>>) src(%271 : memref<128xf32, #tpu.memory_space<any>>) dst(%273 : memref<128xf32, #tpu.memory_space<vmem>>)
    %c0_i32_160 = arith.constant 0 : i32
    %c15_i32_161 = arith.constant 15 : i32
    %c15_i32_162 = arith.constant 15 : i32
    %c0_i32_163 = arith.constant 0 : i32
    %276 = tpu.memref_slice %arg3[%c0_i32_160, %c0_i32_163] : memref<64x128xf32, #tpu.memory_space<any>> -> memref<1x128xf32, #tpu.memory_space<any>>
    %277 = tpu.memref_squeeze %276 : memref<1x128xf32, #tpu.memory_space<any>> -> memref<128xf32, #tpu.memory_space<any>>
    %c0_i32_164 = arith.constant 0 : i32
    %278 = tpu.memref_slice %arg9[%c15_i32_161, %c0_i32_164] : memref<16x128xf32, #tpu.memory_space<vmem>> -> memref<1x128xf32, #tpu.memory_space<vmem>>
    %279 = tpu.memref_squeeze %278 : memref<1x128xf32, #tpu.memory_space<vmem>> -> memref<128xf32, #tpu.memory_space<vmem>>
    %280 = tpu.memref_slice %arg10[%c15_i32_162] : memref<16x!tpu.dma_semaphore, #tpu.memory_space<semaphore_mem>> -> memref<1x!tpu.dma_semaphore, #tpu.memory_space<semaphore_mem>>
    %281 = tpu.memref_squeeze %280 : memref<1x!tpu.dma_semaphore, #tpu.memory_space<semaphore_mem>> -> memref<!tpu.dma_semaphore, #tpu.memory_space<semaphore_mem>>
    tpu.wait_dma2 semaphore(%281 : memref<!tpu.dma_semaphore, #tpu.memory_space<semaphore_mem>>) src(%277 : memref<128xf32, #tpu.memory_space<any>>) dst(%279 : memref<128xf32, #tpu.memory_space<vmem>>)
    %c8 = arith.constant 8 : index
    %c0_165 = arith.constant 0 : index
    %282 = vector.load %arg9[%c8, %c0_165] : memref<16x128xf32, #tpu.memory_space<vmem>>, vector<8x128xf32>
    %c8_166 = arith.constant 8 : index
    %c0_167 = arith.constant 0 : index
    %283 = vector.load %arg2[%c8_166, %c0_167] : memref<16x1xi32, #tpu.memory_space<vmem>>, vector<8x1xi32>
    %c0_i32_168 = arith.constant 0 : i32
    %284 = vector.broadcast %c0_i32_168 : i32 to vector<8x1xi32>
    %285 = arith.cmpi eq, %283, %284 : vector<8x1xi32>
    %c0_169 = arith.constant 0 : index
    %c0_170 = arith.constant 0 : index
    %286 = vector.load %arg4[%c0_169, %c0_170] : memref<2x128xf32, #tpu.memory_space<vmem>>, vector<1x128xf32>
    %c1_171 = arith.constant 1 : index
    %c0_172 = arith.constant 0 : index
    %287 = vector.load %arg4[%c1_171, %c0_172] : memref<2x128xf32, #tpu.memory_space<vmem>>, vector<1x128xf32>
    %288 = vector.shape_cast %285 : vector<8x1xi1> to vector<8x1xi1>
    %289 = vector.broadcast %288 : vector<8x1xi1> to vector<8x128xi1>
    %290 = vector.shape_cast %286 : vector<1x128xf32> to vector<1x128xf32>
    %291 = vector.broadcast %290 : vector<1x128xf32> to vector<8x128xf32>
    %292 = vector.shape_cast %287 : vector<1x128xf32> to vector<1x128xf32>
    %293 = vector.broadcast %292 : vector<1x128xf32> to vector<8x128xf32>
    %294 = arith.select %289, %291, %293 : vector<8x128xi1>, vector<8x128xf32>
    %295 = arith.addf %282, %294 : vector<8x128xf32>
    %c8_173 = arith.constant 8 : index
    %c0_174 = arith.constant 0 : index
    %296 = vector.load %arg5[%c8_173, %c0_174] : memref<16x128xf32, #tpu.memory_space<vmem>>, vector<8x128xf32>
    %297 = arith.addf %295, %296 : vector<8x128xf32>
    %cst_175 = arith.constant dense<0.000000e+00> : vector<8xf32>
    %298 = vector.multi_reduction <add>, %297, %cst_175 [1] : vector<8x128xf32> to vector<8xf32>
    %299 = vector.shape_cast %298 : vector<8xf32> to vector<8x1xf32>
    %cst_176 = arith.constant 1.280000e+02 : f32
    %300 = vector.broadcast %cst_176 : f32 to vector<8x1xf32>
    %301 = arith.divf %299, %300 : vector<8x1xf32>
    %302 = vector.broadcast %301 : vector<8x1xf32> to vector<8x128xf32>
    %303 = arith.subf %297, %302 : vector<8x128xf32>
    %304 = arith.mulf %303, %303 : vector<8x128xf32>
    %cst_177 = arith.constant dense<0.000000e+00> : vector<8xf32>
    %305 = vector.multi_reduction <add>, %304, %cst_177 [1] : vector<8x128xf32> to vector<8xf32>
    %306 = vector.shape_cast %305 : vector<8xf32> to vector<8x1xf32>
    %cst_178 = arith.constant 1.280000e+02 : f32
    %307 = vector.broadcast %cst_178 : f32 to vector<8x1xf32>
    %308 = arith.divf %306, %307 : vector<8x1xf32>
    %cst_179 = arith.constant 9.99999997E-7 : f32
    %309 = vector.broadcast %cst_179 : f32 to vector<8x1xf32>
    %310 = arith.addf %308, %309 : vector<8x1xf32>
    %311 = math.rsqrt %310 : vector<8x1xf32>
    %c0_180 = arith.constant 0 : index
    %c0_181 = arith.constant 0 : index
    %312 = vector.load %arg6[%c0_180, %c0_181] : memref<1x128xf32, #tpu.memory_space<vmem>>, vector<1x128xf32>
    %313 = vector.broadcast %311 : vector<8x1xf32> to vector<8x128xf32>
    %314 = vector.broadcast %312 : vector<1x128xf32> to vector<8x128xf32>
    %315 = arith.mulf %313, %314 : vector<8x128xf32>
    %316 = arith.mulf %303, %315 : vector<8x128xf32>
    %c0_182 = arith.constant 0 : index
    %c0_183 = arith.constant 0 : index
    %317 = vector.load %arg7[%c0_182, %c0_183] : memref<1x128xf32, #tpu.memory_space<vmem>>, vector<1x128xf32>
    %318 = vector.broadcast %317 : vector<1x128xf32> to vector<8x128xf32>
    %319 = arith.addf %316, %318 : vector<8x128xf32>
    %c8_184 = arith.constant 8 : index
    %c0_185 = arith.constant 0 : index
    %320 = vector.load %arg8[%c8_184, %c0_185] : memref<16x128xf32, #tpu.memory_space<vmem>>, vector<8x128xf32>
    tpu.vector_store %arg8[%c8_184, %c0_185], %319 {strides = array<i32>} : memref<16x128xf32, #tpu.memory_space<vmem>>, vector<8x128xf32>,
    return
  }
  func.func @transform_0(%arg0: i32, %arg1: memref<32xi32, #tpu.memory_space<smem>>) -> (i32, i32) {
    %c0_i32 = arith.constant 0 : i32
    %c0_i32_0 = arith.constant 0 : i32
    return %arg0, %c0_i32 : i32, i32
  }
  func.func @transform_2(%arg0: i32, %arg1: memref<32xi32, #tpu.memory_space<smem>>) -> (i32, i32) {
    %c0_i32 = arith.constant 0 : i32
    %c0_i32_0 = arith.constant 0 : i32
    %c0_i32_1 = arith.constant 0 : i32
    return %c0_i32, %c0_i32_0 : i32, i32
  }
  func.func @transform_3(%arg0: i32, %arg1: memref<32xi32, #tpu.memory_space<smem>>) -> (i32, i32) {
    %c1_i32 = arith.constant 1 : i32
    %c0_i32 = arith.constant 0 : i32
    %0 = arith.cmpi eq, %c1_i32, %c0_i32 : i32
    %c1_i32_0 = arith.constant 1 : i32
    %1 = arith.select %0, %c1_i32_0, %c1_i32 : i32
    %2 = arith.remsi %arg0, %1 : i32
    %c0_i32_1 = arith.constant 0 : i32
    %3 = arith.cmpi ne, %2, %c0_i32_1 : i32
    %c0_i32_2 = arith.constant 0 : i32
    %4 = arith.cmpi slt, %2, %c0_i32_2 : i32
    %c0_i32_3 = arith.constant 0 : i32
    %5 = arith.cmpi slt, %1, %c0_i32_3 : i32
    %6 = arith.xori %4, %5 : i1
    %7 = arith.andi %6, %3 : i1
    %8 = arith.addi %2, %1 : i32
    %9 = arith.select %7, %8, %2 : i32
    %c0_i32_4 = arith.constant 0 : i32
    %c0_i32_5 = arith.constant 0 : i32
    return %9, %c0_i32_4 : i32, i32
  }
  func.func @transform_4(%arg0: i32, %arg1: memref<32xi32, #tpu.memory_space<smem>>) -> (i32, i32) {
    %c0_i32 = arith.constant 0 : i32
    %c0_i32_0 = arith.constant 0 : i32
    %c0_i32_1 = arith.constant 0 : i32
    return %c0_i32, %c0_i32_0 : i32, i32
  }
  func.func @transform_5(%arg0: i32, %arg1: memref<32xi32, #tpu.memory_space<smem>>) -> (i32, i32) {
    %c0_i32 = arith.constant 0 : i32
    %c0_i32_0 = arith.constant 0 : i32
    %c0_i32_1 = arith.constant 0 : i32
    return %c0_i32, %c0_i32_0 : i32, i32
  }
  func.func @transform_6(%arg0: i32, %arg1: memref<32xi32, #tpu.memory_space<smem>>) -> (i32, i32) {
    %c0_i32 = arith.constant 0 : i32
    %c0_i32_0 = arith.constant 0 : i32
    return %arg0, %c0_i32 : i32, i32
  }
}

</mosaic_0001>

<llo_original>
// kernel: tpu_custom_call.1
$region0: #{tpu_custom_call.1}
  #allocation0 [shape = 'u32[]', space=smem, size = 0x4, offset = 0x4, fixed_abs, tag = 'smem constant byte address 0x4 - core index']
  #allocation1 [shape = 'u32[144,128]{1,0:T(1,128)}', space=vmem, size = 0x12000, scoped, tag = 'internal scratch']
  #allocation2 [shape = 'f32[16,128]{1,0:T(8,128)}', space=vmem, size = 0x2000, scoped, tag = 'scratch operand']
  #allocation3 [shape = 's32[16]{0}', space=sflag, size = 0x40, scoped, tag = 'scratch operand']
  #allocation4 [shape = 's32[1]{0}', space=sflag, size = 0x4, scoped, tag = 'scoped memory for tpu_custom_call.1']
  #allocation5 [shape = 'u8[512]{0}', space=smem, size = 0x200, scoped, tag = 'prefetched SMEM operand 0']
  #allocation8 [shape = 's32[]', space=sflag, size = 0x4, offset = 0, fixed_abs, tag = 'sflag constant byte address 0x0 - dummy sync flag']
  #allocation9 [shape = 's32[]', space=sflag, size = 0x4, offset = 0, fixed_abs, tag = 'sflag constant byte address 0x0 - dummy sync flag']
  #allocation10 [shape = 'u32[]', space=smem, size = 0x4, offset = 0x44, fixed_abs, tag = 'smem constant byte address 0x44 - assertion arg 0']
  #allocation11 [shape = 'u32[]', space=smem, size = 0x4, offset = 0x48, fixed_abs, tag = 'smem constant byte address 0x48 - assertion arg 1']
  #allocation12 [shape = 's32[]', space=sflag, size = 0x4, offset = 0, fixed_abs, tag = 'sflag constant byte address 0x0 - dummy sync flag']
  #allocation13 [shape = 's32[]', space=sflag, size = 0x4, offset = 0, fixed_abs, tag = 'sflag constant byte address 0x0 - dummy sync flag']
  #allocation14 [shape = 's32[]', space=sflag, size = 0x4, offset = 0, fixed_abs, tag = 'sflag constant byte address 0x0 - dummy sync flag']
  #allocation15 [shape = 's32[]', space=sflag, size = 0x4, offset = 0, fixed_abs, tag = 'sflag constant byte address 0x0 - dummy sync flag']
  #allocation16 [shape = 's32[]', space=sflag, size = 0x4, offset = 0, fixed_abs, tag = 'sflag constant byte address 0x0 - dummy sync flag']
  #allocation17 [shape = 's32[]', space=sflag, size = 0x4, offset = 0, fixed_abs, tag = 'sflag constant byte address 0x0 - dummy sync flag']
  #allocation18 [shape = 's32[]', space=sflag, size = 0x4, offset = 0, fixed_abs, tag = 'sflag constant byte address 0x0 - dummy sync flag']
  #allocation19 [shape = 's32[]', space=sflag, size = 0x4, offset = 0, fixed_abs, tag = 'sflag constant byte address 0x0 - dummy sync flag']
  #allocation20 [shape = 's32[]', space=sflag, size = 0x4, offset = 0, fixed_abs, tag = 'sflag constant byte address 0x0 - dummy sync flag']
  #allocation21 [shape = 's32[]', space=sflag, size = 0x4, offset = 0, fixed_abs, tag = 'sflag constant byte address 0x0 - dummy sync flag']
  #allocation22 [shape = 's32[]', space=sflag, size = 0x4, offset = 0, fixed_abs, tag = 'sflag constant byte address 0x0 - dummy sync flag']
  #allocation23 [shape = 's32[]', space=sflag, size = 0x4, offset = 0, fixed_abs, tag = 'sflag constant byte address 0x0 - dummy sync flag']
  #allocation24 [shape = 's32[]', space=sflag, size = 0x4, offset = 0, fixed_abs, tag = 'sflag constant byte address 0x0 - dummy sync flag']
  #allocation25 [shape = 's32[]', space=sflag, size = 0x4, offset = 0, fixed_abs, tag = 'sflag constant byte address 0x0 - dummy sync flag']
  #allocation26 [shape = 's32[]', space=sflag, size = 0x4, offset = 0, fixed_abs, tag = 'sflag constant byte address 0x0 - dummy sync flag']
  #allocation27 [shape = 's32[]', space=sflag, size = 0x4, offset = 0, fixed_abs, tag = 'sflag constant byte address 0x0 - dummy sync flag']
  #allocation28 [shape = 's32[]', space=sflag, size = 0x4, offset = 0, fixed_abs, tag = 'sflag constant byte address 0x0 - dummy sync flag']
  #allocation29 [shape = 's32[]', space=sflag, size = 0x4, offset = 0, fixed_abs, tag = 'sflag constant byte address 0x0 - dummy sync flag']
  #allocation30 [shape = 's32[]', space=sflag, size = 0x4, offset = 0, fixed_abs, tag = 'sflag constant byte address 0x0 - dummy sync flag']
  #allocation31 [shape = 's32[]', space=sflag, size = 0x4, offset = 0, fixed_abs, tag = 'sflag constant byte address 0x0 - dummy sync flag']
  #allocation32 [shape = 's32[]', space=sflag, size = 0x4, offset = 0, fixed_abs, tag = 'sflag constant byte address 0x0 - dummy sync flag']
  #allocation33 [shape = 's32[]', space=sflag, size = 0x4, offset = 0, fixed_abs, tag = 'sflag constant byte address 0x0 - dummy sync flag']
  #allocation34 [shape = 's32[]', space=sflag, size = 0x4, offset = 0, fixed_abs, tag = 'sflag constant byte address 0x0 - dummy sync flag']
  #allocation35 [shape = 's32[]', space=sflag, size = 0x4, offset = 0, fixed_abs, tag = 'sflag constant byte address 0x0 - dummy sync flag']
  #allocation36 [shape = 's32[]', space=sflag, size = 0x4, offset = 0, fixed_abs, tag = 'sflag constant byte address 0x0 - dummy sync flag']
  #allocation37 [shape = 's32[]', space=sflag, size = 0x4, offset = 0, fixed_abs, tag = 'sflag constant byte address 0x0 - dummy sync flag']
  #allocation38 [shape = 's32[]', space=sflag, size = 0x4, offset = 0, fixed_abs, tag = 'sflag constant byte address 0x0 - dummy sync flag']
  #allocation39 [shape = 's32[]', space=sflag, size = 0x4, offset = 0, fixed_abs, tag = 'sflag constant byte address 0x0 - dummy sync flag']
  #allocation40 [shape = 's32[]', space=sflag, size = 0x4, offset = 0, fixed_abs, tag = 'sflag constant byte address 0x0 - dummy sync flag']
  #allocation41 [shape = 's32[]', space=sflag, size = 0x4, offset = 0, fixed_abs, tag = 'sflag constant byte address 0x0 - dummy sync flag']
  %s0 = inlined_call_operand.vmem [shape: s32[32], index: 0, kind: input, shape index: {}]
  %s1 = inlined_call_operand.vmem [shape: s32[32,1], index: 1, kind: input, shape index: {}]
  %s2 = inlined_call_operand.hbm [shape: f32[64,128], index: 2, kind: input, shape index: {}]
  %s3 = inlined_call_operand.vmem [shape: f32[2,128], index: 3, kind: input, shape index: {}]
  %s4 = inlined_call_operand.vmem [shape: f32[32,128], index: 4, kind: input, shape index: {}]
  %s5 = inlined_call_operand.vmem [shape: f32[1,128], index: 5, kind: input, shape index: {}]
  %s6 = inlined_call_operand.vmem [shape: f32[1,128], index: 6, kind: input, shape index: {}]
  %s7 = inlined_call_operand.hbm [shape: f32[32,128], index: 7, kind: output, shape index: {}]
  %s8 = sld [smem:[#allocation0]]
  $region117: #{tpu_custom_call.1} parent=0
    _
  %s10 = ssub.s32 1, %s8
  %s11 = scalar_select 0, %s10, %s8
  %s12 = sshll.u32 %s0, 4
  %s13 = int_to_ptr.vmem [resolvable:$true] %s12
  %15 = dma.vmem_to_smem %s13, 16, [#allocation5], [#allocation4]
  %16 = dma.done [#allocation4], 16
  %17 = sfence
  $region1: #{tpu_custom_call.1} parent=0
    #allocation6 [shape = 'u8[16384]{0}', space=vmem, size = 0x4000, scoped, tag = 'output window, operand 0']
    #allocation7 [shape = 's32[2]{0}', space=sflag, size = 0x8, scoped, tag = 'scoped memory for tpu_custom_call.1']
    %18 = vsyncpa [#allocation7], 0
    %s19 = scalar_lea.sflag [#allocation7], 1
    %20 = vsyncpa %s19, 0
    loop: start=0, step=1, limit=4
    $region2: #{tpu_custom_call.1} parent=1 // loop_pre_header
      _
    $region3: #{tpu_custom_call.1} parent=1 // loop_header
      %s22 = sphi 0, %s26
      %p23 = scmp.ge.s32.totalorder %s22, 4
      %s32 = sphi 0, %s34
      %s35 = sphi 0, %s32
      %s36 = sphi 0, %s35
      %s52 = sphi 0, %s36
      %s56 = sphi 0, %s56
      %s58 = sphi 0, %s56
      %s59 = sphi 0, %s58
      %s73 = sphi 0, %s59
      %s77 = sphi 0, %s77
      %s79 = sphi 0, %s77
      %s80 = sphi 0, %s79
      %s94 = sphi 0, %s80
      %s98 = sphi 0, %s98
      %s100 = sphi 0, %s98
      %s101 = sphi 0, %s100
      %s115 = sphi 0, %s101
      %s119 = sphi 0, %s119
      %s121 = sphi 0, %s119
      %s122 = sphi 0, %s121
      %s136 = sphi 0, %s122
      %s142 = sphi 0, %s144
      %s145 = sphi 0, %s142
      %s146 = sphi 0, %s145
      %s162 = sphi 0, %s146
    $region4: #{tpu_custom_call.1} parent=1 // loop_header_branch
      %25 = sbr.rel (%p23) target = $region8
    $region5: #{tpu_custom_call.1} parent=1 // loop_body
      %s27 = ssub.s32 %s22, 1
      %s28 = ssub.s32 %s22, 2
      %s29 = sadd.s32 %s22, 1
      %s30 = ssub.s32 %s22, %s29
      %p31 = scmp.eq.s32.totalorder %s30, 0
      %s33 = sadd.s32 %s32, 1
      %s34 = scalar_select %p31, %s32, %s33
      %p37 = pneg %p31
      %p38 = scmp.eq.s32.totalorder %s22, 1
      %p39 = por %p37, %p38
      %p40 = scmp.ne.s32.totalorder %s32, %s35
      %p41 = scmp.eq.s32.totalorder %s22, 0
      %p42 = por %p40, %p41
      %p43 = scmp.ne.s32.totalorder %s32, %s35
      %p44 = scmp.eq.s32.totalorder %s27, 1
      %p45 = por %p43, %p44
      %p46 = scmp.ne.s32.totalorder %s35, %s36
      %p47 = scmp.eq.s32.totalorder %s27, 0
      %p48 = por %p46, %p47
      %p49 = scmp.ne.s32.totalorder %s35, %s36
      %p50 = scmp.eq.s32.totalorder %s28, 1
      %p51 = por %p49, %p50
      %p53 = scmp.ne.s32.totalorder %s36, %s52
      %p54 = scmp.eq.s32.totalorder %s28, 0
      %p55 = por %p53, %p54
      %s57 = sadd.s32 %s56, 1
      %p60 = scmp.eq.s32.totalorder %s22, 1
      %p61 = scmp.ne.s32.totalorder %s56, %s58
      %p62 = scmp.eq.s32.totalorder %s22, 0
      %p63 = por %p61, %p62
      %p64 = scmp.ne.s32.totalorder %s56, %s58
      %p65 = scmp.eq.s32.totalorder %s27, 1
      %p66 = por %p64, %p65
      %p67 = scmp.ne.s32.totalorder %s58, %s59
      %p68 = scmp.eq.s32.totalorder %s27, 0
      %p69 = por %p67, %p68
      %p70 = scmp.ne.s32.totalorder %s58, %s59
      %p71 = scmp.eq.s32.totalorder %s28, 1
      %p72 = por %p70, %p71
      %p74 = scmp.ne.s32.totalorder %s59, %s73
      %p75 = scmp.eq.s32.totalorder %s28, 0
      %p76 = por %p74, %p75
      %s78 = sadd.s32 %s77, 1
      %p81 = scmp.eq.s32.totalorder %s22, 1
      %p82 = scmp.ne.s32.totalorder %s77, %s79
      %p83 = scmp.eq.s32.totalorder %s22, 0
      %p84 = por %p82, %p83
      %p85 = scmp.ne.s32.totalorder %s77, %s79
      %p86 = scmp.eq.s32.totalorder %s27, 1
      %p87 = por %p85, %p86
      %p88 = scmp.ne.s32.totalorder %s79, %s80
      %p89 = scmp.eq.s32.totalorder %s27, 0
      %p90 = por %p88, %p89
      %p91 = scmp.ne.s32.totalorder %s79, %s80
      %p92 = scmp.eq.s32.totalorder %s28, 1
      %p93 = por %p91, %p92
      %p95 = scmp.ne.s32.totalorder %s80, %s94
      %p96 = scmp.eq.s32.totalorder %s28, 0
      %p97 = por %p95, %p96
      %s99 = sadd.s32 %s98, 1
      %p102 = scmp.eq.s32.totalorder %s22, 1
      %p103 = scmp.ne.s32.totalorder %s98, %s100
      %p104 = scmp.eq.s32.totalorder %s22, 0
      %p105 = por %p103, %p104
      %p106 = scmp.ne.s32.totalorder %s98, %s100
      %p107 = scmp.eq.s32.totalorder %s27, 1
      %p108 = por %p106, %p107
      %p109 = scmp.ne.s32.totalorder %s100, %s101
      %p110 = scmp.eq.s32.totalorder %s27, 0
      %p111 = por %p109, %p110
      %p112 = scmp.ne.s32.totalorder %s100, %s101
      %p113 = scmp.eq.s32.totalorder %s28, 1
      %p114 = por %p112, %p113
      %p116 = scmp.ne.s32.totalorder %s101, %s115
      %p117 = scmp.eq.s32.totalorder %s28, 0
      %p118 = por %p116, %p117
      %s120 = sadd.s32 %s119, 1
      %p123 = scmp.eq.s32.totalorder %s22, 1
      %p124 = scmp.ne.s32.totalorder %s119, %s121
      %p125 = scmp.eq.s32.totalorder %s22, 0
      %p126 = por %p124, %p125
      %p127 = scmp.ne.s32.totalorder %s119, %s121
      %p128 = scmp.eq.s32.totalorder %s27, 1
      %p129 = por %p127, %p128
      %p130 = scmp.ne.s32.totalorder %s121, %s122
      %p131 = scmp.eq.s32.totalorder %s27, 0
      %p132 = por %p130, %p131
      %p133 = scmp.ne.s32.totalorder %s121, %s122
      %p134 = scmp.eq.s32.totalorder %s28, 1
      %p135 = por %p133, %p134
      %p137 = scmp.ne.s32.totalorder %s122, %s136
      %p138 = scmp.eq.s32.totalorder %s28, 0
      %p139 = por %p137, %p138
      %s140 = ssub.s32 %s22, %s29
      %p141 = scmp.eq.s32.totalorder %s140, 0
      %s143 = sadd.s32 %s142, 1
      %s144 = scalar_select %p141, %s142, %s143
      %p147 = pneg %p141
      %p148 = scmp.eq.s32.totalorder %s22, 1
      %p149 = por %p147, %p148
      %p150 = scmp.ne.s32.totalorder %s142, %s145
      %p151 = scmp.eq.s32.totalorder %s22, 0
      %p152 = por %p150, %p151
      %p153 = scmp.ne.s32.totalorder %s142, %s145
      %p154 = scmp.eq.s32.totalorder %s27, 1
      %p155 = por %p153, %p154
      %p156 = scmp.ne.s32.totalorder %s145, %s146
      %p157 = scmp.eq.s32.totalorder %s27, 0
      %p158 = por %p156, %p157
      %p159 = scmp.ne.s32.totalorder %s145, %s146
      %p160 = scmp.eq.s32.totalorder %s28, 1
      %p161 = por %p159, %p160
      %p163 = scmp.ne.s32.totalorder %s146, %s162
      %p164 = scmp.eq.s32.totalorder %s28, 0
      %p165 = por %p163, %p164
      %p166 = scmp.le.s32.totalorder 1, %s22
      %p167 = scmp.lt.s32.totalorder %s22, 3
      %p168 = pnand %p166, %p167
      %p169 = pneg %p168
      // Predicated region
      $region9: #{tpu_custom_call.1} parent=5 // pred_check
        _
      $region10: #{tpu_custom_call.1} parent=5 // pred_check_branch
        %171 = sbr.rel (%p168) target = $region12
      $region11: #{tpu_custom_call.1} parent=5 // pred_region
        %s172 = ssub.s32 %s22, 1
        // Predicated region
        $region13: #{tpu_custom_call.1} parent=11 // pred_check
          %p173 = pneg %p69
        $region14: #{tpu_custom_call.1} parent=11 // pred_check_branch
          %175 = sbr.rel (%p173) target = $region16
        $region15: #{tpu_custom_call.1} parent=11 // pred_region
          _
        $region16: #{tpu_custom_call.1} parent=11 // pred_fallthru
          _
        // Predicated region
        $region17: #{tpu_custom_call.1} parent=11 // pred_check
          %p176 = pneg %p90
        $region18: #{tpu_custom_call.1} parent=11 // pred_check_branch
          %178 = sbr.rel (%p176) target = $region20
        $region19: #{tpu_custom_call.1} parent=11 // pred_region
          _
        $region20: #{tpu_custom_call.1} parent=11 // pred_fallthru
          _
        // Predicated region
        $region21: #{tpu_custom_call.1} parent=11 // pred_check
          %p179 = pneg %p111
        $region22: #{tpu_custom_call.1} parent=11 // pred_check_branch
          %181 = sbr.rel (%p179) target = $region24
        $region23: #{tpu_custom_call.1} parent=11 // pred_region
          _
        $region24: #{tpu_custom_call.1} parent=11 // pred_fallthru
          _
        // Predicated region
        $region25: #{tpu_custom_call.1} parent=11 // pred_check
          %p182 = pneg %p132
        $region26: #{tpu_custom_call.1} parent=11 // pred_check_branch
          %184 = sbr.rel (%p182) target = $region28
        $region27: #{tpu_custom_call.1} parent=11 // pred_region
          _
        $region28: #{tpu_custom_call.1} parent=11 // pred_fallthru
          _
      $region12: #{tpu_custom_call.1} parent=5 // pred_fallthru
        _
      %p185 = scmp.lt.s32.totalorder %s22, 2
      // Predicated region
      $region29: #{tpu_custom_call.1} parent=5 // pred_check
        %p186 = pneg %p185
      $region30: #{tpu_custom_call.1} parent=5 // pred_check_branch
        %188 = sbr.rel (%p186) target = $region32
      $region31: #{tpu_custom_call.1} parent=5 // pred_region
        // Predicated region
        $region33: #{tpu_custom_call.1} parent=31 // pred_check
          %p189 = pneg %p42
        $region34: #{tpu_custom_call.1} parent=31 // pred_check_branch
          %191 = sbr.rel (%p189) target = $region36
        $region35: #{tpu_custom_call.1} parent=31 // pred_region
          %s192 = smul.u32 2, %s22
          %p193 = scmp.lt.s32.totalorder %s192, 3
          %s194 = scalar_select %p193, %s192, 3
          %s195 = smul.addr %s194, 8
          %s196 = scalar_lea.vmem %s1, %s195
          %s197 = smul.u32 2, %s22
        $region36: #{tpu_custom_call.1} parent=31 // pred_fallthru
          _
      $region32: #{tpu_custom_call.1} parent=5 // pred_fallthru
        _
      %p198 = scmp.le.s32.totalorder 1, %s22
      %p199 = scmp.lt.s32.totalorder %s22, 3
      %p200 = pnand %p198, %p199
      %p201 = pneg %p200
      // Predicated region
      $region37: #{tpu_custom_call.1} parent=5 // pred_check
        _
      $region38: #{tpu_custom_call.1} parent=5 // pred_check_branch
        %203 = sbr.rel (%p200) target = $region40
      $region39: #{tpu_custom_call.1} parent=5 // pred_region
        %s204 = ssub.s32 %s22, 1
        %s205 = smul.u32 2, %s27
        %p206 = scmp.lt.s32.totalorder %s205, 3
        %s207 = scalar_select %p206, %s205, 3
        %s208 = smul.addr %s207, 8
        %s209 = scalar_lea.vmem %s1, %s208
        %p210 = pneg %p48
        %p211 = pneg %p45
        %p212 = pneg %p69
        %p213 = pneg %p66
        %p214 = pneg %p90
        %p215 = pneg %p87
        %p216 = pneg %p111
        %p217 = pneg %p108
        %p218 = pneg %p132
        %p219 = pneg %p129
        %p220 = pneg %p158
        %p221 = pneg %p155
        %s222 = sand.u32 %s145, 1
        %s223 = scalar_lea.sflag [#allocation7], %s222
        %s224 = sand.u32 %s145, 1
        %s225 = smul.addr %s224, 16
        %s226 = scalar_lea.vmem [#allocation6], %s225
        %s227 = smul.u32 2, %s27
        %p228 = scmp.lt.s32.totalorder %s227, 3
        %s229 = scalar_select %p228, %s227, 3
        %s230 = smul.addr %s229, 8
        %s231 = scalar_lea.vmem %s1, %s230
        %s232 = smul.u32 2, %s27
        %s233 = smul.u32 2, %s27
        %s234 = smul.u32 %s27, 16
        %s235 = sld [smem:[#allocation5 + %s234]]
        %s236 = smul.addr %s235, 16
        %s237 = scalar_lea.hbm %s2, %s236
        // Predicated region
        $region41: #{tpu_custom_call.1} parent=39 // pred_check
          _
        $region42: #{tpu_custom_call.1} parent=39 // pred_check_branch
          %239 = sbr.rel target = $region44
        $region43: #{tpu_custom_call.1} parent=39 // pred_region
          %240 = sst [smem:[#allocation10]] [#allocation9]
          %241 = sst [smem:[#allocation11]] [#allocation8]
        $region44: #{tpu_custom_call.1} parent=39 // pred_fallthru
          _
        %243 = shalt.err (0)
        %s245 = sshll.u32 [#allocation2], 4
        %s246 = int_to_ptr.vmem [resolvable:$true] %s245
        %248 = dma.hbm_to_vmem [thread:$0]  %s237, 16, %s246, [#allocation3]
        %s249 = sadd.s32 %s234, 1
        %s250 = sld [smem:[#allocation5 + %s249]]
        %s251 = smul.addr %s250, 16
        %s252 = scalar_lea.hbm %s2, %s251
        %s253 = scalar_lea.vmem [#allocation2], 1
        %s254 = scalar_lea.sflag [#allocation3], 1
        // Predicated region
        $region45: #{tpu_custom_call.1} parent=39 // pred_check
          _
        $region46: #{tpu_custom_call.1} parent=39 // pred_check_branch
          %256 = sbr.rel target = $region48
        $region47: #{tpu_custom_call.1} parent=39 // pred_region
          %257 = sst [smem:[#allocation10]] [#allocation13]
          %258 = sst [smem:[#allocation11]] [#allocation12]
        $region48: #{tpu_custom_call.1} parent=39 // pred_fallthru
          _
        %260 = shalt.err (0)
        %s262 = sshll.u32 %s253, 4
        %s263 = int_to_ptr.vmem [resolvable:$true] %s262
        %265 = dma.hbm_to_vmem [thread:$0]  %s252, 16, %s263, %s254
        %s266 = sadd.s32 %s234, 2
        %s267 = sld [smem:[#allocation5 + %s266]]
        %s268 = smul.addr %s267, 16
        %s269 = scalar_lea.hbm %s2, %s268
        %s270 = scalar_lea.vmem [#allocation2], 2
        %s271 = scalar_lea.sflag [#allocation3], 2
        // Predicated region
        $region49: #{tpu_custom_call.1} parent=39 // pred_check
          _
        $region50: #{tpu_custom_call.1} parent=39 // pred_check_branch
          %273 = sbr.rel target = $region52
        $region51: #{tpu_custom_call.1} parent=39 // pred_region
          %274 = sst [smem:[#allocation10]] [#allocation15]
          %275 = sst [smem:[#allocation11]] [#allocation14]
        $region52: #{tpu_custom_call.1} parent=39 // pred_fallthru
          _
        %277 = shalt.err (0)
        %s279 = sshll.u32 %s270, 4
        %s280 = int_to_ptr.vmem [resolvable:$true] %s279
        %282 = dma.hbm_to_vmem [thread:$0]  %s269, 16, %s280, %s271
        %s283 = sadd.s32 %s234, 3
        %s284 = sld [smem:[#allocation5 + %s283]]
        %s285 = smul.addr %s284, 16
        %s286 = scalar_lea.hbm %s2, %s285
        %s287 = scalar_lea.vmem [#allocation2], 3
        %s288 = scalar_lea.sflag [#allocation3], 3
        // Predicated region
        $region53: #{tpu_custom_call.1} parent=39 // pred_check
          _
        $region54: #{tpu_custom_call.1} parent=39 // pred_check_branch
          %290 = sbr.rel target = $region56
        $region55: #{tpu_custom_call.1} parent=39 // pred_region
          %291 = sst [smem:[#allocation10]] [#allocation17]
          %292 = sst [smem:[#allocation11]] [#allocation16]
        $region56: #{tpu_custom_call.1} parent=39 // pred_fallthru
          _
        %294 = shalt.err (0)
        %s296 = sshll.u32 %s287, 4
        %s297 = int_to_ptr.vmem [resolvable:$true] %s296
        %299 = dma.hbm_to_vmem [thread:$0]  %s286, 16, %s297, %s288
        %s300 = sadd.s32 %s234, 4
        %s301 = sld [smem:[#allocation5 + %s300]]
        %s302 = smul.addr %s301, 16
        %s303 = scalar_lea.hbm %s2, %s302
        %s304 = scalar_lea.vmem [#allocation2], 4
        %s305 = scalar_lea.sflag [#allocation3], 4
        // Predicated region
        $region57: #{tpu_custom_call.1} parent=39 // pred_check
          _
        $region58: #{tpu_custom_call.1} parent=39 // pred_check_branch
          %307 = sbr.rel target = $region60
        $region59: #{tpu_custom_call.1} parent=39 // pred_region
          %308 = sst [smem:[#allocation10]] [#allocation19]
          %309 = sst [smem:[#allocation11]] [#allocation18]
        $region60: #{tpu_custom_call.1} parent=39 // pred_fallthru
          _
        %311 = shalt.err (0)
        %s313 = sshll.u32 %s304, 4
        %s314 = int_to_ptr.vmem [resolvable:$true] %s313
        %316 = dma.hbm_to_vmem [thread:$0]  %s303, 16, %s314, %s305
        %s317 = sadd.s32 %s234, 5
        %s318 = sld [smem:[#allocation5 + %s317]]
        %s319 = smul.addr %s318, 16
        %s320 = scalar_lea.hbm %s2, %s319
        %s321 = scalar_lea.vmem [#allocation2], 5
        %s322 = scalar_lea.sflag [#allocation3], 5
        // Predicated region
        $region61: #{tpu_custom_call.1} parent=39 // pred_check
          _
        $region62: #{tpu_custom_call.1} parent=39 // pred_check_branch
          %324 = sbr.rel target = $region64
        $region63: #{tpu_custom_call.1} parent=39 // pred_region
          %325 = sst [smem:[#allocation10]] [#allocation21]
          %326 = sst [smem:[#allocation11]] [#allocation20]
        $region64: #{tpu_custom_call.1} parent=39 // pred_fallthru
          _
        %328 = shalt.err (0)
        %s330 = sshll.u32 %s321, 4
        %s331 = int_to_ptr.vmem [resolvable:$true] %s330
        %333 = dma.hbm_to_vmem [thread:$0]  %s320, 16, %s331, %s322
        %s334 = sadd.s32 %s234, 6
        %s335 = sld [smem:[#allocation5 + %s334]]
        %s336 = smul.addr %s335, 16
        %s337 = scalar_lea.hbm %s2, %s336
        %s338 = scalar_lea.vmem [#allocation2], 6
        %s339 = scalar_lea.sflag [#allocation3], 6
        // Predicated region
        $region65: #{tpu_custom_call.1} parent=39 // pred_check
          _
        $region66: #{tpu_custom_call.1} parent=39 // pred_check_branch
          %341 = sbr.rel target = $region68
        $region67: #{tpu_custom_call.1} parent=39 // pred_region
          %342 = sst [smem:[#allocation10]] [#allocation23]
          %343 = sst [smem:[#allocation11]] [#allocation22]
        $region68: #{tpu_custom_call.1} parent=39 // pred_fallthru
          _
        %345 = shalt.err (0)
        %s347 = sshll.u32 %s338, 4
        %s348 = int_to_ptr.vmem [resolvable:$true] %s347
        %350 = dma.hbm_to_vmem [thread:$0]  %s337, 16, %s348, %s339
        %s351 = sadd.s32 %s234, 7
        %s352 = sld [smem:[#allocation5 + %s351]]
        %s353 = smul.addr %s352, 16
        %s354 = scalar_lea.hbm %s2, %s353
        %s355 = scalar_lea.vmem [#allocation2], 7
        %s356 = scalar_lea.sflag [#allocation3], 7
        // Predicated region
        $region69: #{tpu_custom_call.1} parent=39 // pred_check
          _
        $region70: #{tpu_custom_call.1} parent=39 // pred_check_branch
          %358 = sbr.rel target = $region72
        $region71: #{tpu_custom_call.1} parent=39 // pred_region
          %359 = sst [smem:[#allocation10]] [#allocation25]
          %360 = sst [smem:[#allocation11]] [#allocation24]
        $region72: #{tpu_custom_call.1} parent=39 // pred_fallthru
          _
        %362 = shalt.err (0)
        %s364 = sshll.u32 %s355, 4
        %s365 = int_to_ptr.vmem [resolvable:$true] %s364
        %367 = dma.hbm_to_vmem [thread:$0]  %s354, 16, %s365, %s356
        %s368 = sadd.s32 %s234, 8
        %s369 = sld [smem:[#allocation5 + %s368]]
        %s370 = smul.addr %s369, 16
        %s371 = scalar_lea.hbm %s2, %s370
        %s372 = scalar_lea.vmem [#allocation2], 8
        %s373 = scalar_lea.sflag [#allocation3], 8
        // Predicated region
        $region73: #{tpu_custom_call.1} parent=39 // pred_check
          _
        $region74: #{tpu_custom_call.1} parent=39 // pred_check_branch
          %375 = sbr.rel target = $region76
        $region75: #{tpu_custom_call.1} parent=39 // pred_region
          %376 = sst [smem:[#allocation10]] [#allocation27]
          %377 = sst [smem:[#allocation11]] [#allocation26]
        $region76: #{tpu_custom_call.1} parent=39 // pred_fallthru
          _
        %379 = shalt.err (0)
        %s381 = sshll.u32 %s372, 4
        %s382 = int_to_ptr.vmem [resolvable:$true] %s381
        %384 = dma.hbm_to_vmem [thread:$0]  %s371, 16, %s382, %s373
        %s385 = sadd.s32 %s234, 9
        %s386 = sld [smem:[#allocation5 + %s385]]
        %s387 = smul.addr %s386, 16
        %s388 = scalar_lea.hbm %s2, %s387
        %s389 = scalar_lea.vmem [#allocation2], 9
        %s390 = scalar_lea.sflag [#allocation3], 9
        // Predicated region
        $region77: #{tpu_custom_call.1} parent=39 // pred_check
          _
        $region78: #{tpu_custom_call.1} parent=39 // pred_check_branch
          %392 = sbr.rel target = $region80
        $region79: #{tpu_custom_call.1} parent=39 // pred_region
          %393 = sst [smem:[#allocation10]] [#allocation29]
          %394 = sst [smem:[#allocation11]] [#allocation28]
        $region80: #{tpu_custom_call.1} parent=39 // pred_fallthru
          _
        %396 = shalt.err (0)
        %s398 = sshll.u32 %s389, 4
        %s399 = int_to_ptr.vmem [resolvable:$true] %s398
        %401 = dma.hbm_to_vmem [thread:$0]  %s388, 16, %s399, %s390
        %s402 = sadd.s32 %s234, 10
        %s403 = sld [smem:[#allocation5 + %s402]]
        %s404 = smul.addr %s403, 16
        %s405 = scalar_lea.hbm %s2, %s404
        %s406 = scalar_lea.vmem [#allocation2], 10
        %s407 = scalar_lea.sflag [#allocation3], 10
        // Predicated region
        $region81: #{tpu_custom_call.1} parent=39 // pred_check
          _
        $region82: #{tpu_custom_call.1} parent=39 // pred_check_branch
          %409 = sbr.rel target = $region84
        $region83: #{tpu_custom_call.1} parent=39 // pred_region
          %410 = sst [smem:[#allocation10]] [#allocation31]
          %411 = sst [smem:[#allocation11]] [#allocation30]
        $region84: #{tpu_custom_call.1} parent=39 // pred_fallthru
          _
        %413 = shalt.err (0)
        %s415 = sshll.u32 %s406, 4
        %s416 = int_to_ptr.vmem [resolvable:$true] %s415
        %418 = dma.hbm_to_vmem [thread:$0]  %s405, 16, %s416, %s407
        %s419 = sadd.s32 %s234, 11
        %s420 = sld [smem:[#allocation5 + %s419]]
        %s421 = smul.addr %s420, 16
        %s422 = scalar_lea.hbm %s2, %s421
        %s423 = scalar_lea.vmem [#allocation2], 11
        %s424 = scalar_lea.sflag [#allocation3], 11
        // Predicated region
        $region85: #{tpu_custom_call.1} parent=39 // pred_check
          _
        $region86: #{tpu_custom_call.1} parent=39 // pred_check_branch
          %426 = sbr.rel target = $region88
        $region87: #{tpu_custom_call.1} parent=39 // pred_region
          %427 = sst [smem:[#allocation10]] [#allocation33]
          %428 = sst [smem:[#allocation11]] [#allocation32]
        $region88: #{tpu_custom_call.1} parent=39 // pred_fallthru
          _
        %430 = shalt.err (0)
        %s432 = sshll.u32 %s423, 4
        %s433 = int_to_ptr.vmem [resolvable:$true] %s432
        %435 = dma.hbm_to_vmem [thread:$0]  %s422, 16, %s433, %s424
        %s436 = sadd.s32 %s234, 12
        %s437 = sld [smem:[#allocation5 + %s436]]
        %s438 = smul.addr %s437, 16
        %s439 = scalar_lea.hbm %s2, %s438
        %s440 = scalar_lea.vmem [#allocation2], 12
        %s441 = scalar_lea.sflag [#allocation3], 12
        // Predicated region
        $region89: #{tpu_custom_call.1} parent=39 // pred_check
          _
        $region90: #{tpu_custom_call.1} parent=39 // pred_check_branch
          %443 = sbr.rel target = $region92
        $region91: #{tpu_custom_call.1} parent=39 // pred_region
          %444 = sst [smem:[#allocation10]] [#allocation35]
          %445 = sst [smem:[#allocation11]] [#allocation34]
        $region92: #{tpu_custom_call.1} parent=39 // pred_fallthru
          _
        %447 = shalt.err (0)
        %s449 = sshll.u32 %s440, 4
        %s450 = int_to_ptr.vmem [resolvable:$true] %s449
        %452 = dma.hbm_to_vmem [thread:$0]  %s439, 16, %s450, %s441
        %s453 = sadd.s32 %s234, 13
        %s454 = sld [smem:[#allocation5 + %s453]]
        %s455 = smul.addr %s454, 16
        %s456 = scalar_lea.hbm %s2, %s455
        %s457 = scalar_lea.vmem [#allocation2], 13
        %s458 = scalar_lea.sflag [#allocation3], 13
        // Predicated region
        $region93: #{tpu_custom_call.1} parent=39 // pred_check
          _
        $region94: #{tpu_custom_call.1} parent=39 // pred_check_branch
          %460 = sbr.rel target = $region96
        $region95: #{tpu_custom_call.1} parent=39 // pred_region
          %461 = sst [smem:[#allocation10]] [#allocation37]
          %462 = sst [smem:[#allocation11]] [#allocation36]
        $region96: #{tpu_custom_call.1} parent=39 // pred_fallthru
          _
        %464 = shalt.err (0)
        %s466 = sshll.u32 %s457, 4
        %s467 = int_to_ptr.vmem [resolvable:$true] %s466
        %469 = dma.hbm_to_vmem [thread:$0]  %s456, 16, %s467, %s458
        %s470 = sadd.s32 %s234, 14
        %s471 = sld [smem:[#allocation5 + %s470]]
        %s472 = smul.addr %s471, 16
        %s473 = scalar_lea.hbm %s2, %s472
        %s474 = scalar_lea.vmem [#allocation2], 14
        %s475 = scalar_lea.sflag [#allocation3], 14
        // Predicated region
        $region97: #{tpu_custom_call.1} parent=39 // pred_check
          _
        $region98: #{tpu_custom_call.1} parent=39 // pred_check_branch
          %477 = sbr.rel target = $region100
        $region99: #{tpu_custom_call.1} parent=39 // pred_region
          %478 = sst [smem:[#allocation10]] [#allocation39]
          %479 = sst [smem:[#allocation11]] [#allocation38]
        $region100: #{tpu_custom_call.1} parent=39 // pred_fallthru
          _
        %481 = shalt.err (0)
        %s483 = sshll.u32 %s474, 4
        %s484 = int_to_ptr.vmem [resolvable:$true] %s483
        %486 = dma.hbm_to_vmem [thread:$0]  %s473, 16, %s484, %s475
        %s487 = sadd.s32 %s234, 15
        %s488 = sld [smem:[#allocation5 + %s487]]
        %s489 = smul.addr %s488, 16
        %s490 = scalar_lea.hbm %s2, %s489
        %s491 = scalar_lea.vmem [#allocation2], 15
        %s492 = scalar_lea.sflag [#allocation3], 15
        // Predicated region
        $region101: #{tpu_custom_call.1} parent=39 // pred_check
          _
        $region102: #{tpu_custom_call.1} parent=39 // pred_check_branch
          %494 = sbr.rel target = $region104
        $region103: #{tpu_custom_call.1} parent=39 // pred_region
          %495 = sst [smem:[#allocation10]] [#allocation41]
          %496 = sst [smem:[#allocation11]] [#allocation40]
        $region104: #{tpu_custom_call.1} parent=39 // pred_fallthru
          _
        %498 = shalt.err (0)
        %s500 = sshll.u32 %s491, 4
        %s501 = int_to_ptr.vmem [resolvable:$true] %s500
        %503 = dma.hbm_to_vmem [thread:$0]  %s490, 16, %s501, %s492
        %505 = dma.done [#allocation3], 16
        %507 = dma.done %s254, 16
        %509 = dma.done %s271, 16
        %511 = dma.done %s288, 16
        %513 = dma.done %s305, 16
        %515 = dma.done %s322, 16
        %517 = dma.done %s339, 16
        %519 = dma.done %s356, 16
        %v520 = vld [vmem:[#allocation2] sm:$0xff]
        %v521 = vld [vmem:[%s231] sm:$0xff]
        %vm522 = vcmp.eq.s32.totalorder %v521, 0
        %v523 = vld [vmem:[%s3] sm:$0x1]
        %v524 = vld [vmem:[%s3 + $0x1] sm:$0x1]
        %v525 = vsel %vm522, 1, 0
        %526 = vset.pattern.permute.xlu0 0
        %527 = vperm.xlu0 %526, %v525
        %v528 = vpop.permute.xlu0 %527
        %vm529 = vcmp.eq.s32.totalorder %v528, 1
        %v530 = vlaneseq
        %v531 = vshrl.u32 %v530, 7
        %v532 = vsub.s32 0, %v531
        %v533 = vrot.slane %v523, %v532
        %v534 = vlaneseq
        %v535 = vshrl.u32 %v534, 7
        %v536 = vsub.s32 0, %v535
        %v537 = vrot.slane %v524, %v536
        %v538 = vsel %vm529, %v533, %v537
        %v539 = vadd.f32 %v520, %v538
        %v540 = vld [vmem:[%s4] sm:$0xff]
        %v541 = vadd.f32 %v539, %v540
        %542 = vadd.xlane.f32.xlu0 %v541
        %v543 = vpop.xlane.xlu0 %542
        %v544 = vrcp.pop 128.0
        %v545 = vmul.f32 %v543, %v544
        %v546 = vsub.f32 %v541, %v545
        %v547 = vmul.f32 %v546, %v546
        %548 = vadd.xlane.f32.xlu0 %v547
        %v549 = vpop.xlane.xlu0 %548
        %v550 = vmul.f32 %v549, %v544
        %v551 = vadd.f32 %v550, 1e-06
        %v552 = vrsqrt.pop %v551
        %v553 = vld [vmem:[%s5] sm:$0x1]
        %v555 = vlaneseq
        %v556 = vshrl.u32 %v555, 7
        %v557 = vsub.s32 0, %v556
        %v558 = vrot.slane %v553, %v557
        %v560 = vmul.f32 %v552, %v558
        %v561 = vmul.f32 %v546, %v560
        %v562 = vld [vmem:[%s6] sm:$0x1]
        %v564 = vlaneseq
        %v565 = vshrl.u32 %v564, 7
        %v566 = vsub.s32 0, %v565
        %v567 = vrot.slane %v562, %v566
        %v569 = vadd.f32 %v561, %v567
        %570 = vst [vmem:[%s226] sm:$0xff] %v569
        %572 = dma.done %s373, 16
        %574 = dma.done %s390, 16
        %576 = dma.done %s407, 16
        %578 = dma.done %s424, 16
        %580 = dma.done %s441, 16
        %582 = dma.done %s458, 16
        %584 = dma.done %s475, 16
        %586 = dma.done %s492, 16
        %v587 = vld [vmem:[#allocation2 + $0x8] sm:$0xff]
        %v588 = vld [vmem:[%s231 + $0x8] sm:$0xff]
        %vm589 = vcmp.eq.s32.totalorder %v588, 0
        %v590 = vld [vmem:[%s3] sm:$0x1]
        %v591 = vld [vmem:[%s3 + $0x1] sm:$0x1]
        %v592 = vsel %vm589, 1, 0
        %593 = vset.pattern.permute.xlu0 0
        %594 = vperm.xlu0 %593, %v592
        %v595 = vpop.permute.xlu0 %594
        %vm596 = vcmp.eq.s32.totalorder %v595, 1
        %v597 = vlaneseq
        %v598 = vshrl.u32 %v597, 7
        %v599 = vsub.s32 0, %v598
        %v600 = vrot.slane %v590, %v599
        %v601 = vlaneseq
        %v602 = vshrl.u32 %v601, 7
        %v603 = vsub.s32 0, %v602
        %v604 = vrot.slane %v591, %v603
        %v605 = vsel %vm596, %v600, %v604
        %v606 = vadd.f32 %v587, %v605
        %v607 = vld [vmem:[%s4 + $0x8] sm:$0xff]
        %v608 = vadd.f32 %v606, %v607
        %609 = vadd.xlane.f32.xlu0 %v608
        %v610 = vpop.xlane.xlu0 %609
        %v611 = vmul.f32 %v610, %v544
        %v612 = vsub.f32 %v608, %v611
        %v613 = vmul.f32 %v612, %v612
        %614 = vadd.xlane.f32.xlu0 %v613
        %v615 = vpop.xlane.xlu0 %614
        %v616 = vmul.f32 %v615, %v544
        %v617 = vadd.f32 %v616, 1e-06
        %v618 = vrsqrt.pop %v617
        %v619 = vld [vmem:[%s5] sm:$0x1]
        %v621 = vlaneseq
        %v622 = vshrl.u32 %v621, 7
        %v623 = vsub.s32 0, %v622
        %v624 = vrot.slane %v619, %v623
        %v626 = vmul.f32 %v618, %v624
        %v627 = vmul.f32 %v612, %v626
        %v628 = vld [vmem:[%s6] sm:$0x1]
        %v630 = vlaneseq
        %v631 = vshrl.u32 %v630, 7
        %v632 = vsub.s32 0, %v631
        %v633 = vrot.slane %v628, %v632
        %v635 = vadd.f32 %v627, %v633
        %636 = vst [vmem:[%s226 + $0x8] sm:$0xff] %v635
        %s637 = sand.u32 %s145, 1
        %s638 = scalar_lea.sflag [#allocation7], %s637
        %s639 = sand.u32 %s145, 1
        %s640 = smul.addr %s639, 16
        %s641 = scalar_lea.vmem [#allocation6], %s640
        // Predicated region
        $region105: #{tpu_custom_call.1} parent=39 // pred_check
          %p642 = pneg %p155
        $region106: #{tpu_custom_call.1} parent=39 // pred_check_branch
          %644 = sbr.rel (%p642) target = $region108
        $region107: #{tpu_custom_call.1} parent=39 // pred_region
          %s645 = smul.u32 2, %s27
          %s647 = ssub.s32 256, 256
          %648 = vsyncadd %s638, %s647
          %s649 = smul.addr %s645, 128
          %s650 = scalar_lea.hbm %s7, %s649
          %s651 = sshll.u32 %s641, 4
          %s652 = int_to_ptr.vmem [resolvable:$true] %s651
          %657 = dma.vmem_to_hbm [thread:$0]  %s652, 256, %s650, %s638, 128, 128, 8
        $region108: #{tpu_custom_call.1} parent=39 // pred_fallthru
          _
      $region40: #{tpu_custom_call.1} parent=5 // pred_fallthru
        _
      %p658 = scmp.le.s32.totalorder 2, %s22
      // Predicated region
      $region109: #{tpu_custom_call.1} parent=5 // pred_check
        %p659 = pneg %p658
      $region110: #{tpu_custom_call.1} parent=5 // pred_check_branch
        %661 = sbr.rel (%p659) target = $region112
      $region111: #{tpu_custom_call.1} parent=5 // pred_region
        %s662 = ssub.s32 %s22, 2
        // Predicated region
        $region113: #{tpu_custom_call.1} parent=111 // pred_check
          %p663 = pneg %p161
        $region114: #{tpu_custom_call.1} parent=111 // pred_check_branch
          %665 = sbr.rel (%p663) target = $region116
        $region115: #{tpu_custom_call.1} parent=111 // pred_region
          %s666 = sand.u32 %s146, 1
          %s667 = scalar_lea.sflag [#allocation7], %s666
          %s668 = sand.u32 %s146, 1
          %s669 = smul.addr %s668, 16
          %s670 = scalar_lea.vmem [#allocation6], %s669
          %671 = dma.done %s667, 256
        $region116: #{tpu_custom_call.1} parent=111 // pred_fallthru
          _
      $region112: #{tpu_custom_call.1} parent=5 // pred_fallthru
        _
    $region6: #{tpu_custom_call.1} parent=1 // loop_footer
      %s26 = sadd.s32 1, %s22
    $region7: #{tpu_custom_call.1} parent=1 // loop_footer_branch
      %21 = sbr.rel target = $region3
    $region8: #{tpu_custom_call.1} parent=1 // loop_exit
      _
    %672 = vsyncpa [#allocation7], 1
    %s673 = scalar_lea.sflag [#allocation7], 1
    %674 = vsyncpa %s673, 1
  %675 = vsyncmov [#allocation3]
  %s676 = vpop.sfrf %675
  %p677 = scmp.eq.s32.totalorder %s676, 0
  %p678 = pneg %p677
  %680 = shalt.err (%p678)
  %s681 = scalar_lea.sflag [#allocation3], 1
  %682 = vsyncmov %s681
  %s683 = vpop.sfrf %682
  %p684 = scmp.eq.s32.totalorder %s683, 0
  %p685 = pneg %p684
  %687 = shalt.err (%p685)
  %s688 = scalar_lea.sflag [#allocation3], 2
  %689 = vsyncmov %s688
  %s690 = vpop.sfrf %689
  %p691 = scmp.eq.s32.totalorder %s690, 0
  %p692 = pneg %p691
  %694 = shalt.err (%p692)
  %s695 = scalar_lea.sflag [#allocation3], 3
  %696 = vsyncmov %s695
  %s697 = vpop.sfrf %696
  %p698 = scmp.eq.s32.totalorder %s697, 0
  %p699 = pneg %p698
  %701 = shalt.err (%p699)
  %s702 = scalar_lea.sflag [#allocation3], 4
  %703 = vsyncmov %s702
  %s704 = vpop.sfrf %703
  %p705 = scmp.eq.s32.totalorder %s704, 0
  %p706 = pneg %p705
  %708 = shalt.err (%p706)
  %s709 = scalar_lea.sflag [#allocation3], 5
  %710 = vsyncmov %s709
  %s711 = vpop.sfrf %710
  %p712 = scmp.eq.s32.totalorder %s711, 0
  %p713 = pneg %p712
  %715 = shalt.err (%p713)
  %s716 = scalar_lea.sflag [#allocation3], 6
  %717 = vsyncmov %s716
  %s718 = vpop.sfrf %717
  %p719 = scmp.eq.s32.totalorder %s718, 0
  %p720 = pneg %p719
  %722 = shalt.err (%p720)
  %s723 = scalar_lea.sflag [#allocation3], 7
  %724 = vsyncmov %s723
  %s725 = vpop.sfrf %724
  %p726 = scmp.eq.s32.totalorder %s725, 0
  %p727 = pneg %p726
  %729 = shalt.err (%p727)
  %s730 = scalar_lea.sflag [#allocation3], 8
  %731 = vsyncmov %s730
  %s732 = vpop.sfrf %731
  %p733 = scmp.eq.s32.totalorder %s732, 0
  %p734 = pneg %p733
  %736 = shalt.err (%p734)
  %s737 = scalar_lea.sflag [#allocation3], 9
  %738 = vsyncmov %s737
  %s739 = vpop.sfrf %738
  %p740 = scmp.eq.s32.totalorder %s739, 0
  %p741 = pneg %p740
  %743 = shalt.err (%p741)
  %s744 = scalar_lea.sflag [#allocation3], 10
  %745 = vsyncmov %s744
  %s746 = vpop.sfrf %745
  %p747 = scmp.eq.s32.totalorder %s746, 0
  %p748 = pneg %p747
  %750 = shalt.err (%p748)
  %s751 = scalar_lea.sflag [#allocation3], 11
  %752 = vsyncmov %s751
  %s753 = vpop.sfrf %752
  %p754 = scmp.eq.s32.totalorder %s753, 0
  %p755 = pneg %p754
  %757 = shalt.err (%p755)
  %s758 = scalar_lea.sflag [#allocation3], 12
  %759 = vsyncmov %s758
  %s760 = vpop.sfrf %759
  %p761 = scmp.eq.s32.totalorder %s760, 0
  %p762 = pneg %p761
  %764 = shalt.err (%p762)
  %s765 = scalar_lea.sflag [#allocation3], 13
  %766 = vsyncmov %s765
  %s767 = vpop.sfrf %766
  %p768 = scmp.eq.s32.totalorder %s767, 0
  %p769 = pneg %p768
  %771 = shalt.err (%p769)
  %s772 = scalar_lea.sflag [#allocation3], 14
  %773 = vsyncmov %s772
  %s774 = vpop.sfrf %773
  %p775 = scmp.eq.s32.totalorder %s774, 0
  %p776 = pneg %p775
  %778 = shalt.err (%p776)
  %s779 = scalar_lea.sflag [#allocation3], 15
  %780 = vsyncmov %s779
  %s781 = vpop.sfrf %780
  %p782 = scmp.eq.s32.totalorder %s781, 0
  %p783 = pneg %p782
  %785 = shalt.err (%p783)

</llo_original>
